<compile_context>
chip_gen: v7x
topology: tpu7x:2x2x1
jax: 0.10.0
libtpu: 0.0.40
codegen_flags: <defaults>
</compile_context>

<pallas_src>
import functools

import jax
import jax.numpy as jnp
from jax.experimental import pallas as pl
from jax.experimental.pallas import tpu as pltpu


def _multihead_kernel(x_ref, wk_ref, wp_ref, bp_ref, o_ref, *,
                      block_b, seq_len, num_heads, mxu_dtype):
    """One grid step handles `block_b` batch elements (rows pre-flattened).

    x_ref  : (block_b*T, C)  input tokens, row-major over (b, t)
    wk_ref : (C, C)          fused per-head `key` weights (in, out); column
                             block h = head h (pre-cast to mxu_dtype)
    wp_ref : (C, C)          output projection weight (in, out), mxu_dtype
    bp_ref : (1, C)          output projection bias, f32
    o_ref  : (block_b*T, C)  output
    """
    BT, C = x_ref.shape
    T = seq_len
    H = num_heads
    hs = C // H
    Bblk = block_b
    scale = C ** (-0.5)

    # Causal (tril) additive mask, built once per grid step and broadcast over
    # the in-block batch dimension (hoisted out of the head loop).
    row = jax.lax.broadcasted_iota(jnp.int32, (T, T), 0)
    col = jax.lax.broadcasted_iota(jnp.int32, (T, T), 1)
    neg_mask = jnp.where(row >= col, 0.0, -1e30).astype(jnp.float32)[None]  # (1,T,T)

    # --- One fused K projection for all heads: (BT, C) @ (C, C) on the MXU.
    # q = k = v = key(x) in the reference module, so this is the only input
    # projection needed.
    x2 = x_ref[...].astype(mxu_dtype)
    k_all = jnp.dot(x2, wk_ref[...], preferred_element_type=jnp.float32)  # (BT, C) f32
    k3 = k_all.reshape(Bblk, T, C)            # split rows back into (batch, time)

    wp = wp_ref[...]                           # (C, C) mxu_dtype, loaded once

    # --- Per-head attention, batched over the in-block batch dim.  The output
    # projection is folded per head so no concat scratch / narrow masked
    # stores are ever issued; everything lives in vregs until the final store.
    out_acc = jnp.zeros((BT, C), jnp.float32)
    for h in range(H):                         # H is small & static -> unrolled
        k_h = k3[:, :, h * hs:(h + 1) * hs].astype(mxu_dtype)   # (Bblk, T, hs)
        scores = jnp.einsum('btd,bsd->bts', k_h, k_h,
                            preferred_element_type=jnp.float32) * scale
        scores = scores + neg_mask             # causal mask (additive)
        # numerically-stable softmax; all elementwise math in f32
        m = jnp.max(scores, axis=-1, keepdims=True)
        e = jnp.exp(scores - m)
        denom = jnp.sum(e, axis=-1, keepdims=True)
        p = e * pl.reciprocal(denom, approx=True)               # EUP slot
        ctx = jnp.einsum('bts,bsd->btd', p.astype(mxu_dtype), k_h,
                         preferred_element_type=jnp.float32)    # (Bblk, T, hs)
        # Folded output projection for this head: (BT, hs) @ (hs, C).
        wp_h = wp[h * hs:(h + 1) * hs, :]                        # (hs, C)
        out_acc = out_acc + jnp.dot(ctx.reshape(BT, hs).astype(mxu_dtype), wp_h,
                                    preferred_element_type=jnp.float32)

    # Single contiguous full-ref store (+ bias).
    o_ref[...] = (out_acc + bp_ref[...]).astype(o_ref.dtype)


def _default_block_b(B, T, C):
    """Pick the in-block batch size (grid = B // block_b).

    At small shapes each grid step carries far less than the ~0.35us per-step
    pipeline overhead, so one fat step (grid=1) wins on every generation
    (v5e/v6e have a single TensorCore anyway).  Split the batch across two
    "parallel" steps (v7x megacore) only when per-step work can amortize it.
    """
    if B >= 2 and B % 2 == 0:
        # rough per-half-step MXU flops: K proj + attention + output proj
        flops_half_step = (B // 2) * T * 4 * C * (C + T)
        if flops_half_step > 5_000_000:        # ~> 1us of MXU work per step
            return B // 2
    return B


def multihead_forward(x, wk_stack, wp, bp, *, block_b=None,
                      mxu_dtype=jnp.bfloat16):
    """x: (B, T, C), wk_stack: (H, C, hs), wp: (C, C) (in,out), bp: (C,)."""
    B, T, C = x.shape
    H, Cin, hs = wk_stack.shape
    assert Cin == C and H * hs == C

    # Fuse per-head key weights into a single (C, C) matrix host-side (column
    # block h = head h) and pre-cast weights to the MXU input dtype: halves
    # weight DMA bytes and removes per-step VPU casts in the kernel.
    wk_all = jnp.transpose(wk_stack, (1, 0, 2)).reshape(C, C).astype(mxu_dtype)
    wp_m = wp.astype(mxu_dtype)
    bp2 = bp.reshape(1, C).astype(jnp.float32)

    # Pre-flatten tokens to (B*T, C): 2-D row blocks in/out, no in-kernel ref
    # reshapes, single lane-dense output store.
    x2d = x.reshape(B * T, C)

    if block_b is None:
        block_b = _default_block_b(B, T, C)
    assert B % block_b == 0
    grid_b = B // block_b

    kernel = functools.partial(_multihead_kernel, block_b=block_b, seq_len=T,
                               num_heads=H, mxu_dtype=mxu_dtype)

    out2d = pl.pallas_call(
        kernel,
        out_shape=jax.ShapeDtypeStruct((B * T, C), x.dtype),
        grid_spec=pltpu.PrefetchScalarGridSpec(
            num_scalar_prefetch=0,
            grid=(grid_b,),
            in_specs=[
                pl.BlockSpec((block_b * T, C), lambda b: (b, 0)),
                # Weight/bias blocks are grid-invariant -> VMEM resident.
                pl.BlockSpec((C, C), lambda b: (0, 0)),
                pl.BlockSpec((C, C), lambda b: (0, 0)),
                pl.BlockSpec((1, C), lambda b: (0, 0)),
            ],
            out_specs=pl.BlockSpec((block_b * T, C), lambda b: (b, 0)),
        ),
        compiler_params=pltpu.CompilerParams(
            dimension_semantics=("parallel",),
            vmem_limit_bytes=32 * 1024 * 1024),
    )(x2d, wk_all, wp_m, bp2)

    return out2d.reshape(B, T, C)


def multihead_reference(x, wk_stack, wp, bp):
    """Pure-JAX reference mirroring the PyTorch forward (eval mode)."""
    B, T, C = x.shape
    H = wk_stack.shape[0]
    outs = []
    for h in range(H):
        k = x @ wk_stack[h]                                   # (B, T, hs)
        scores = jnp.einsum("btd,bsd->bts", k, k) * (C ** -0.5)
        mask = jnp.tril(jnp.ones((T, T), dtype=bool))
        scores = jnp.where(mask, scores, -jnp.inf)
        p = jax.nn.softmax(scores, axis=-1)
        outs.append(jnp.einsum("bts,bsd->btd", p, k))
    cat = jnp.concatenate(outs, axis=-1)
    return cat @ wp + bp


if __name__ == "__main__":
    # small shapes consistent with the module
    B, T = 2, 8                # batch, seq (T == block_size)
    n_embed = 32
    num_heads = 4
    head_size = n_embed // num_heads   # 8
    dropout_rate = 0.1                 # identity in eval semantics

    key = jax.random.PRNGKey(0)
    k_x, k_wk, k_wp, k_bp = jax.random.split(key, 4)

    x = jax.random.normal(k_x, (B, T, n_embed), dtype=jnp.float32)

    # deterministic parameter init (PyTorch Linear-style uniform bounds)
    bound_k = 1.0 / (n_embed ** 0.5)
    # stacked `key` weights per head, (H, in, out). (query/value weights exist
    # in the PyTorch module but are unused by its forward, so omitted here.)
    wk_stack = jax.random.uniform(
        k_wk, (num_heads, n_embed, head_size),
        minval=-bound_k, maxval=bound_k, dtype=jnp.float32)
    wp = jax.random.uniform(
        k_wp, (n_embed, n_embed), minval=-bound_k, maxval=bound_k,
        dtype=jnp.float32)
    bp = jax.random.uniform(
        k_bp, (n_embed,), minval=-bound_k, maxval=bound_k, dtype=jnp.float32)

    ref = multihead_reference(x, wk_stack, wp, bp)

    # Optimized default path: bf16 MXU inputs, f32 accumulate / softmax.
    out_bf16 = jax.block_until_ready(
        multihead_forward(x, wk_stack, wp, bp, mxu_dtype=jnp.bfloat16))
    assert out_bf16.shape == (B, T, n_embed)
    assert jnp.allclose(out_bf16, ref, atol=3e-2, rtol=3e-2), (
        float(jnp.max(jnp.abs(out_bf16 - ref))))

    # Full-f32 MXU path for a tighter numerical check (approx reciprocal is
    # the only remaining source of divergence from the exact reference).
    out_f32 = jax.block_until_ready(
        multihead_forward(x, wk_stack, wp, bp, mxu_dtype=jnp.float32))
    assert jnp.allclose(out_f32, ref, atol=2e-3, rtol=2e-3), (
        float(jnp.max(jnp.abs(out_f32 - ref))))

    print("KERNEL_OK")
</pallas_src>

<mosaic_0001>
module attributes {stable_mosaic.version = 11 : i64} {
  func.func @_multihead_kernel(%arg0: i32, %arg1: memref<16x32xf32, #tpu.memory_space<vmem>>, %arg2: memref<32x32xbf16, #tpu.memory_space<vmem>>, %arg3: memref<32x32xbf16, #tpu.memory_space<vmem>>, %arg4: memref<1x32xf32, #tpu.memory_space<vmem>>, %arg5: memref<16x32xf32, #tpu.memory_space<vmem>>) attributes {dimension_semantics = [#tpu.dimension_semantics<parallel>], iteration_bounds = array<i64: 1>, scalar_prefetch = 0 : i64, scratch_operands = 0 : i64, tpu.core_type = #tpu.core_type<tc>, window_params = [{transform_indices = @transform_0, window_bounds = array<i64: 16, 32>}, {pipeline_mode = #tpu.pipeline_mode<synchronous>, transform_indices = @transform_1, window_bounds = array<i64: 32, 32>}, {pipeline_mode = #tpu.pipeline_mode<synchronous>, transform_indices = @transform_2, window_bounds = array<i64: 32, 32>}, {pipeline_mode = #tpu.pipeline_mode<synchronous>, transform_indices = @transform_3, window_bounds = array<i64: 1, 32>}, {transform_indices = @transform_4, window_bounds = array<i64: 16, 32>}]} {
    %0 = tpu.iota {dimensions = array<i32: 0>} : vector<8x8xi32>
    %1 = tpu.iota {dimensions = array<i32: 1>} : vector<8x8xi32>
    %2 = arith.cmpi sge, %0, %1 : vector<8x8xi32>
    %cst = arith.constant 0.000000e+00 : f32
    %cst_0 = arith.constant -1.000000e+30 : f32
    %3 = vector.broadcast %cst : f32 to vector<8x8xf32>
    %4 = vector.broadcast %cst_0 : f32 to vector<8x8xf32>
    %5 = arith.select %2, %3, %4 : vector<8x8xi1>, vector<8x8xf32>
    %6 = vector.shape_cast %5 : vector<8x8xf32> to vector<1x8x8xf32>
    %c0 = arith.constant 0 : index
    %c0_1 = arith.constant 0 : index
    %7 = vector.load %arg1[%c0, %c0_1] : memref<16x32xf32, #tpu.memory_space<vmem>>, vector<16x32xf32>
    %8 = arith.truncf %7 : vector<16x32xf32> to vector<16x32xbf16>
    %c0_2 = arith.constant 0 : index
    %c0_3 = arith.constant 0 : index
    %9 = vector.load %arg2[%c0_2, %c0_3] : memref<32x32xbf16, #tpu.memory_space<vmem>>, vector<32x32xbf16>
    %cst_4 = arith.constant dense<0.000000e+00> : vector<16x32xf32>
    %10 = tpu.matmul %8, %9, %cst_4 {dimension_numbers = #tpu.dot_dimension_numbers<[1], [0], [0], [1], [0, 0, 1, 1], [], []>} : vector<16x32xbf16>, vector<32x32xbf16>, vector<16x32xf32> -> vector<16x32xf32>
    %11 = vector.shape_cast %10 : vector<16x32xf32> to vector<2x8x32xf32>
    %c0_5 = arith.constant 0 : index
    %c0_6 = arith.constant 0 : index
    %12 = vector.load %arg3[%c0_5, %c0_6] : memref<32x32xbf16, #tpu.memory_space<vmem>>, vector<32x32xbf16>
    %cst_7 = arith.constant 0.000000e+00 : f32
    %13 = vector.broadcast %cst_7 : f32 to vector<16x32xf32>
    %14 = vector.extract_strided_slice %11 {offsets = [0, 0, 0], sizes = [2, 8, 8], strides = [1, 1, 1]} : vector<2x8x32xf32> to vector<2x8x8xf32>
    %15 = arith.truncf %14 : vector<2x8x8xf32> to vector<2x8x8xbf16>
    "tpu.trace_start"() <{level = 10 : i32, message = "btd,bsd->bts"}> : () -> ()
    %cst_8 = arith.constant dense<0.000000e+00> : vector<2x8x8xf32>
    %16 = tpu.matmul %15, %15, %cst_8 {dimension_numbers = #tpu.dot_dimension_numbers<[2], [2], [1], [1], [0, 0, 0, 1, 1, 1], [0], [0]>} : vector<2x8x8xbf16>, vector<2x8x8xbf16>, vector<2x8x8xf32> -> vector<2x8x8xf32>
    "tpu.trace_stop"() : () -> ()
    %cst_9 = arith.constant 0.176776692 : f32
    %17 = vector.broadcast %cst_9 : f32 to vector<2x8x8xf32>
    %18 = arith.mulf %16, %17 : vector<2x8x8xf32>
    %19 = vector.broadcast %6 : vector<1x8x8xf32> to vector<2x8x8xf32>
    %20 = arith.addf %18, %19 : vector<2x8x8xf32>
    %cst_10 = arith.constant dense<0xFF800000> : vector<2x8xf32>
    %21 = vector.multi_reduction <maximumf>, %20, %cst_10 [2] : vector<2x8x8xf32> to vector<2x8xf32>
    %22 = vector.shape_cast %21 : vector<2x8xf32> to vector<2x8x1xf32>
    %23 = vector.broadcast %22 : vector<2x8x1xf32> to vector<2x8x8xf32>
    %24 = arith.subf %20, %23 : vector<2x8x8xf32>
    %25 = math.exp %24 : vector<2x8x8xf32>
    %cst_11 = arith.constant dense<0.000000e+00> : vector<2x8xf32>
    %26 = vector.multi_reduction <add>, %25, %cst_11 [2] : vector<2x8x8xf32> to vector<2x8xf32>
    %27 = vector.shape_cast %26 : vector<2x8xf32> to vector<2x8x1xf32>
    %28 = tpu.reciprocal %27 {approx = true} : vector<2x8x1xf32> -> vector<2x8x1xf32>
    %29 = vector.broadcast %28 : vector<2x8x1xf32> to vector<2x8x8xf32>
    %30 = arith.mulf %25, %29 : vector<2x8x8xf32>
    %31 = arith.truncf %30 : vector<2x8x8xf32> to vector<2x8x8xbf16>
    "tpu.trace_start"() <{level = 10 : i32, message = "bts,bsd->btd"}> : () -> ()
    %cst_12 = arith.constant dense<0.000000e+00> : vector<2x8x8xf32>
    %32 = tpu.matmul %31, %15, %cst_12 {dimension_numbers = #tpu.dot_dimension_numbers<[2], [1], [1], [2], [0, 0, 0, 1, 1, 2], [0], [0]>} : vector<2x8x8xbf16>, vector<2x8x8xbf16>, vector<2x8x8xf32> -> vector<2x8x8xf32>
    "tpu.trace_stop"() : () -> ()
    %33 = vector.extract_strided_slice %12 {offsets = [0, 0], sizes = [8, 32], strides = [1, 1]} : vector<32x32xbf16> to vector<8x32xbf16>
    %34 = vector.shape_cast %32 : vector<2x8x8xf32> to vector<16x8xf32>
    %35 = arith.truncf %34 : vector<16x8xf32> to vector<16x8xbf16>
    %cst_13 = arith.constant dense<0.000000e+00> : vector<16x32xf32>
    %36 = tpu.matmul %35, %33, %cst_13 {dimension_numbers = #tpu.dot_dimension_numbers<[1], [0], [0], [1], [0, 0, 1, 1], [], []>} : vector<16x8xbf16>, vector<8x32xbf16>, vector<16x32xf32> -> vector<16x32xf32>
    %37 = arith.addf %13, %36 : vector<16x32xf32>
    %38 = vector.extract_strided_slice %11 {offsets = [0, 0, 8], sizes = [2, 8, 8], strides = [1, 1, 1]} : vector<2x8x32xf32> to vector<2x8x8xf32>
    %39 = arith.truncf %38 : vector<2x8x8xf32> to vector<2x8x8xbf16>
    "tpu.trace_start"() <{level = 10 : i32, message = "btd,bsd->bts"}> : () -> ()
    %cst_14 = arith.constant dense<0.000000e+00> : vector<2x8x8xf32>
    %40 = tpu.matmul %39, %39, %cst_14 {dimension_numbers = #tpu.dot_dimension_numbers<[2], [2], [1], [1], [0, 0, 0, 1, 1, 1], [0], [0]>} : vector<2x8x8xbf16>, vector<2x8x8xbf16>, vector<2x8x8xf32> -> vector<2x8x8xf32>
    "tpu.trace_stop"() : () -> ()
    %cst_15 = arith.constant 0.176776692 : f32
    %41 = vector.broadcast %cst_15 : f32 to vector<2x8x8xf32>
    %42 = arith.mulf %40, %41 : vector<2x8x8xf32>
    %43 = vector.broadcast %6 : vector<1x8x8xf32> to vector<2x8x8xf32>
    %44 = arith.addf %42, %43 : vector<2x8x8xf32>
    %cst_16 = arith.constant dense<0xFF800000> : vector<2x8xf32>
    %45 = vector.multi_reduction <maximumf>, %44, %cst_16 [2] : vector<2x8x8xf32> to vector<2x8xf32>
    %46 = vector.shape_cast %45 : vector<2x8xf32> to vector<2x8x1xf32>
    %47 = vector.broadcast %46 : vector<2x8x1xf32> to vector<2x8x8xf32>
    %48 = arith.subf %44, %47 : vector<2x8x8xf32>
    %49 = math.exp %48 : vector<2x8x8xf32>
    %cst_17 = arith.constant dense<0.000000e+00> : vector<2x8xf32>
    %50 = vector.multi_reduction <add>, %49, %cst_17 [2] : vector<2x8x8xf32> to vector<2x8xf32>
    %51 = vector.shape_cast %50 : vector<2x8xf32> to vector<2x8x1xf32>
    %52 = tpu.reciprocal %51 {approx = true} : vector<2x8x1xf32> -> vector<2x8x1xf32>
    %53 = vector.broadcast %52 : vector<2x8x1xf32> to vector<2x8x8xf32>
    %54 = arith.mulf %49, %53 : vector<2x8x8xf32>
    %55 = arith.truncf %54 : vector<2x8x8xf32> to vector<2x8x8xbf16>
    "tpu.trace_start"() <{level = 10 : i32, message = "bts,bsd->btd"}> : () -> ()
    %cst_18 = arith.constant dense<0.000000e+00> : vector<2x8x8xf32>
    %56 = tpu.matmul %55, %39, %cst_18 {dimension_numbers = #tpu.dot_dimension_numbers<[2], [1], [1], [2], [0, 0, 0, 1, 1, 2], [0], [0]>} : vector<2x8x8xbf16>, vector<2x8x8xbf16>, vector<2x8x8xf32> -> vector<2x8x8xf32>
    "tpu.trace_stop"() : () -> ()
    %57 = vector.extract_strided_slice %12 {offsets = [8, 0], sizes = [8, 32], strides = [1, 1]} : vector<32x32xbf16> to vector<8x32xbf16>
    %58 = vector.shape_cast %56 : vector<2x8x8xf32> to vector<16x8xf32>
    %59 = arith.truncf %58 : vector<16x8xf32> to vector<16x8xbf16>
    %cst_19 = arith.constant dense<0.000000e+00> : vector<16x32xf32>
    %60 = tpu.matmul %59, %57, %cst_19 {dimension_numbers = #tpu.dot_dimension_numbers<[1], [0], [0], [1], [0, 0, 1, 1], [], []>} : vector<16x8xbf16>, vector<8x32xbf16>, vector<16x32xf32> -> vector<16x32xf32>
    %61 = arith.addf %37, %60 : vector<16x32xf32>
    %62 = vector.extract_strided_slice %11 {offsets = [0, 0, 16], sizes = [2, 8, 8], strides = [1, 1, 1]} : vector<2x8x32xf32> to vector<2x8x8xf32>
    %63 = arith.truncf %62 : vector<2x8x8xf32> to vector<2x8x8xbf16>
    "tpu.trace_start"() <{level = 10 : i32, message = "btd,bsd->bts"}> : () -> ()
    %cst_20 = arith.constant dense<0.000000e+00> : vector<2x8x8xf32>
    %64 = tpu.matmul %63, %63, %cst_20 {dimension_numbers = #tpu.dot_dimension_numbers<[2], [2], [1], [1], [0, 0, 0, 1, 1, 1], [0], [0]>} : vector<2x8x8xbf16>, vector<2x8x8xbf16>, vector<2x8x8xf32> -> vector<2x8x8xf32>
    "tpu.trace_stop"() : () -> ()
    %cst_21 = arith.constant 0.176776692 : f32
    %65 = vector.broadcast %cst_21 : f32 to vector<2x8x8xf32>
    %66 = arith.mulf %64, %65 : vector<2x8x8xf32>
    %67 = vector.broadcast %6 : vector<1x8x8xf32> to vector<2x8x8xf32>
    %68 = arith.addf %66, %67 : vector<2x8x8xf32>
    %cst_22 = arith.constant dense<0xFF800000> : vector<2x8xf32>
    %69 = vector.multi_reduction <maximumf>, %68, %cst_22 [2] : vector<2x8x8xf32> to vector<2x8xf32>
    %70 = vector.shape_cast %69 : vector<2x8xf32> to vector<2x8x1xf32>
    %71 = vector.broadcast %70 : vector<2x8x1xf32> to vector<2x8x8xf32>
    %72 = arith.subf %68, %71 : vector<2x8x8xf32>
    %73 = math.exp %72 : vector<2x8x8xf32>
    %cst_23 = arith.constant dense<0.000000e+00> : vector<2x8xf32>
    %74 = vector.multi_reduction <add>, %73, %cst_23 [2] : vector<2x8x8xf32> to vector<2x8xf32>
    %75 = vector.shape_cast %74 : vector<2x8xf32> to vector<2x8x1xf32>
    %76 = tpu.reciprocal %75 {approx = true} : vector<2x8x1xf32> -> vector<2x8x1xf32>
    %77 = vector.broadcast %76 : vector<2x8x1xf32> to vector<2x8x8xf32>
    %78 = arith.mulf %73, %77 : vector<2x8x8xf32>
    %79 = arith.truncf %78 : vector<2x8x8xf32> to vector<2x8x8xbf16>
    "tpu.trace_start"() <{level = 10 : i32, message = "bts,bsd->btd"}> : () -> ()
    %cst_24 = arith.constant dense<0.000000e+00> : vector<2x8x8xf32>
    %80 = tpu.matmul %79, %63, %cst_24 {dimension_numbers = #tpu.dot_dimension_numbers<[2], [1], [1], [2], [0, 0, 0, 1, 1, 2], [0], [0]>} : vector<2x8x8xbf16>, vector<2x8x8xbf16>, vector<2x8x8xf32> -> vector<2x8x8xf32>
    "tpu.trace_stop"() : () -> ()
    %81 = vector.extract_strided_slice %12 {offsets = [16, 0], sizes = [8, 32], strides = [1, 1]} : vector<32x32xbf16> to vector<8x32xbf16>
    %82 = vector.shape_cast %80 : vector<2x8x8xf32> to vector<16x8xf32>
    %83 = arith.truncf %82 : vector<16x8xf32> to vector<16x8xbf16>
    %cst_25 = arith.constant dense<0.000000e+00> : vector<16x32xf32>
    %84 = tpu.matmul %83, %81, %cst_25 {dimension_numbers = #tpu.dot_dimension_numbers<[1], [0], [0], [1], [0, 0, 1, 1], [], []>} : vector<16x8xbf16>, vector<8x32xbf16>, vector<16x32xf32> -> vector<16x32xf32>
    %85 = arith.addf %61, %84 : vector<16x32xf32>
    %86 = vector.extract_strided_slice %11 {offsets = [0, 0, 24], sizes = [2, 8, 8], strides = [1, 1, 1]} : vector<2x8x32xf32> to vector<2x8x8xf32>
    %87 = arith.truncf %86 : vector<2x8x8xf32> to vector<2x8x8xbf16>
    "tpu.trace_start"() <{level = 10 : i32, message = "btd,bsd->bts"}> : () -> ()
    %cst_26 = arith.constant dense<0.000000e+00> : vector<2x8x8xf32>
    %88 = tpu.matmul %87, %87, %cst_26 {dimension_numbers = #tpu.dot_dimension_numbers<[2], [2], [1], [1], [0, 0, 0, 1, 1, 1], [0], [0]>} : vector<2x8x8xbf16>, vector<2x8x8xbf16>, vector<2x8x8xf32> -> vector<2x8x8xf32>
    "tpu.trace_stop"() : () -> ()
    %cst_27 = arith.constant 0.176776692 : f32
    %89 = vector.broadcast %cst_27 : f32 to vector<2x8x8xf32>
    %90 = arith.mulf %88, %89 : vector<2x8x8xf32>
    %91 = vector.broadcast %6 : vector<1x8x8xf32> to vector<2x8x8xf32>
    %92 = arith.addf %90, %91 : vector<2x8x8xf32>
    %cst_28 = arith.constant dense<0xFF800000> : vector<2x8xf32>
    %93 = vector.multi_reduction <maximumf>, %92, %cst_28 [2] : vector<2x8x8xf32> to vector<2x8xf32>
    %94 = vector.shape_cast %93 : vector<2x8xf32> to vector<2x8x1xf32>
    %95 = vector.broadcast %94 : vector<2x8x1xf32> to vector<2x8x8xf32>
    %96 = arith.subf %92, %95 : vector<2x8x8xf32>
    %97 = math.exp %96 : vector<2x8x8xf32>
    %cst_29 = arith.constant dense<0.000000e+00> : vector<2x8xf32>
    %98 = vector.multi_reduction <add>, %97, %cst_29 [2] : vector<2x8x8xf32> to vector<2x8xf32>
    %99 = vector.shape_cast %98 : vector<2x8xf32> to vector<2x8x1xf32>
    %100 = tpu.reciprocal %99 {approx = true} : vector<2x8x1xf32> -> vector<2x8x1xf32>
    %101 = vector.broadcast %100 : vector<2x8x1xf32> to vector<2x8x8xf32>
    %102 = arith.mulf %97, %101 : vector<2x8x8xf32>
    %103 = arith.truncf %102 : vector<2x8x8xf32> to vector<2x8x8xbf16>
    "tpu.trace_start"() <{level = 10 : i32, message = "bts,bsd->btd"}> : () -> ()
    %cst_30 = arith.constant dense<0.000000e+00> : vector<2x8x8xf32>
    %104 = tpu.matmul %103, %87, %cst_30 {dimension_numbers = #tpu.dot_dimension_numbers<[2], [1], [1], [2], [0, 0, 0, 1, 1, 2], [0], [0]>} : vector<2x8x8xbf16>, vector<2x8x8xbf16>, vector<2x8x8xf32> -> vector<2x8x8xf32>
    "tpu.trace_stop"() : () -> ()
    %105 = vector.extract_strided_slice %12 {offsets = [24, 0], sizes = [8, 32], strides = [1, 1]} : vector<32x32xbf16> to vector<8x32xbf16>
    %106 = vector.shape_cast %104 : vector<2x8x8xf32> to vector<16x8xf32>
    %107 = arith.truncf %106 : vector<16x8xf32> to vector<16x8xbf16>
    %cst_31 = arith.constant dense<0.000000e+00> : vector<16x32xf32>
    %108 = tpu.matmul %107, %105, %cst_31 {dimension_numbers = #tpu.dot_dimension_numbers<[1], [0], [0], [1], [0, 0, 1, 1], [], []>} : vector<16x8xbf16>, vector<8x32xbf16>, vector<16x32xf32> -> vector<16x32xf32>
    %109 = arith.addf %85, %108 : vector<16x32xf32>
    %c0_32 = arith.constant 0 : index
    %c0_33 = arith.constant 0 : index
    %110 = vector.load %arg4[%c0_32, %c0_33] : memref<1x32xf32, #tpu.memory_space<vmem>>, vector<1x32xf32>
    %111 = vector.broadcast %110 : vector<1x32xf32> to vector<16x32xf32>
    %112 = arith.addf %109, %111 : vector<16x32xf32>
    %c0_34 = arith.constant 0 : index
    %c0_35 = arith.constant 0 : index
    %113 = vector.load %arg5[%c0_34, %c0_35] : memref<16x32xf32, #tpu.memory_space<vmem>>, vector<16x32xf32>
    tpu.vector_store %arg5[%c0_34, %c0_35], %112 {strides = array<i32>} : memref<16x32xf32, #tpu.memory_space<vmem>>, vector<16x32xf32>,
    return
  }
  func.func @transform_0(%arg0: i32) -> (i32, i32) {
    %c0_i32 = arith.constant 0 : i32
    %c0_i32_0 = arith.constant 0 : i32
    return %arg0, %c0_i32 : i32, i32
  }
  func.func @transform_1(%arg0: i32) -> (i32, i32) {
    %c0_i32 = arith.constant 0 : i32
    %c0_i32_0 = arith.constant 0 : i32
    %c0_i32_1 = arith.constant 0 : i32
    return %c0_i32, %c0_i32_0 : i32, i32
  }
  func.func @transform_2(%arg0: i32) -> (i32, i32) {
    %c0_i32 = arith.constant 0 : i32
    %c0_i32_0 = arith.constant 0 : i32
    %c0_i32_1 = arith.constant 0 : i32
    return %c0_i32, %c0_i32_0 : i32, i32
  }
  func.func @transform_3(%arg0: i32) -> (i32, i32) {
    %c0_i32 = arith.constant 0 : i32
    %c0_i32_0 = arith.constant 0 : i32
    %c0_i32_1 = arith.constant 0 : i32
    return %c0_i32, %c0_i32_0 : i32, i32
  }
  func.func @transform_4(%arg0: i32) -> (i32, i32) {
    %c0_i32 = arith.constant 0 : i32
    %c0_i32_0 = arith.constant 0 : i32
    return %arg0, %c0_i32 : i32, i32
  }
}

</mosaic_0001>

<llo_original>
// kernel: tpu_custom_call.1
$region0: #{tpu_custom_call.1}
  #allocation0 [shape = 'u32[]', space=smem, size = 0x4, offset = 0x4, fixed_abs, tag = 'smem constant byte address 0x4 - core index']
  #allocation1 [shape = 'u32[144,128]{1,0:T(1,128)}', space=vmem, size = 0x12000, scoped, tag = 'internal scratch']
  %s0 = inlined_call_operand.hbm [shape: f32[16,32], index: 0, kind: input, shape index: {}]
  %s1 = inlined_call_operand.hbm [shape: bf16[32,32], index: 1, kind: input, shape index: {}]
  %s2 = inlined_call_operand.hbm [shape: bf16[32,32], index: 2, kind: input, shape index: {}]
  %s3 = inlined_call_operand.vmem [shape: f32[1,32], index: 3, kind: input, shape index: {}]
  %s4 = inlined_call_operand.hbm [shape: f32[16,32], index: 4, kind: output, shape index: {}]
  %s5 = sld [smem:[#allocation0]]
  $region38: #{tpu_custom_call.1} parent=0
    _
  %s7 = ssub.s32 1, %s5
  %s8 = scalar_select 0, %s7, %s5
  $region1: #{tpu_custom_call.1} parent=0
    #allocation2 [shape = 'u8[8192]{0}', space=vmem, size = 0x2000, scoped, tag = 'input window, operand 0, single buffered']
    #allocation3 [shape = 's32[1]{0}', space=sflag, size = 0x4, scoped, tag = 'scoped memory for tpu_custom_call.1']
    #allocation4 [shape = 's32[1]{0}', space=sflag, size = 0x4, scoped, tag = 'scoped memory for tpu_custom_call.1']
    #allocation5 [shape = 'u8[8192]{0}', space=vmem, size = 0x2000, scoped, tag = 'input window, operand 1, single buffered']
    #allocation6 [shape = 's32[1]{0}', space=sflag, size = 0x4, scoped, tag = 'scoped memory for tpu_custom_call.1']
    #allocation7 [shape = 'u8[8192]{0}', space=vmem, size = 0x2000, scoped, tag = 'input window, operand 2, single buffered']
    #allocation8 [shape = 'u8[8192]{0}', space=vmem, size = 0x2000, scoped, tag = 'output window, operand 0, single buffered']
    %9 = vsyncpa [#allocation3], 0
    %10 = vsyncpa [#allocation6], 0
    %11 = vsyncpa [#allocation4], 0
    // Predicated region
    $region2: #{tpu_custom_call.1} parent=1 // pred_check
      _
    $region3: #{tpu_custom_call.1} parent=1 // pred_check_branch
      %13 = sbr.rel (0) target = $region5
    $region4: #{tpu_custom_call.1} parent=1 // pred_region
      %s15 = ssub.s32 256, 256
      %16 = vsyncadd [#allocation3], %s15
      %s17 = sshll.u32 [#allocation2], 4
      %s18 = int_to_ptr.vmem [resolvable:$true] %s17
      %23 = dma.hbm_to_vmem [thread:$0]  %s0, 256, %s18, [#allocation3], 128, 128, 8
    $region5: #{tpu_custom_call.1} parent=1 // pred_fallthru
      _
    // Predicated region
    $region6: #{tpu_custom_call.1} parent=1 // pred_check
      _
    $region7: #{tpu_custom_call.1} parent=1 // pred_check_branch
      %25 = sbr.rel (0) target = $region9
    $region8: #{tpu_custom_call.1} parent=1 // pred_region
      %s27 = ssub.s32 256, 256
      %28 = vsyncadd [#allocation6], %s27
      %s29 = sshll.u32 [#allocation5], 4
      %s30 = int_to_ptr.vmem [resolvable:$true] %s29
      %35 = dma.hbm_to_vmem [thread:$0]  %s1, 256, %s30, [#allocation6], 64, 64, 4
    $region9: #{tpu_custom_call.1} parent=1 // pred_fallthru
      _
    // Predicated region
    $region10: #{tpu_custom_call.1} parent=1 // pred_check
      _
    $region11: #{tpu_custom_call.1} parent=1 // pred_check_branch
      %37 = sbr.rel (0) target = $region13
    $region12: #{tpu_custom_call.1} parent=1 // pred_region
      %s39 = ssub.s32 256, 256
      %40 = vsyncadd [#allocation6], %s39
      %s41 = sshll.u32 [#allocation7], 4
      %s42 = int_to_ptr.vmem [resolvable:$true] %s41
      %47 = dma.hbm_to_vmem [thread:$0]  %s2, 256, %s42, [#allocation6], 64, 64, 4
    $region13: #{tpu_custom_call.1} parent=1 // pred_fallthru
      _
    // Predicated region
    $region14: #{tpu_custom_call.1} parent=1 // pred_check
      _
    $region15: #{tpu_custom_call.1} parent=1 // pred_check_branch
      %49 = sbr.rel (0) target = $region17
    $region16: #{tpu_custom_call.1} parent=1 // pred_region
      _
    $region17: #{tpu_custom_call.1} parent=1 // pred_fallthru
      _
    // Predicated region
    $region18: #{tpu_custom_call.1} parent=1 // pred_check
      _
    $region19: #{tpu_custom_call.1} parent=1 // pred_check_branch
      %51 = sbr.rel (0) target = $region21
    $region20: #{tpu_custom_call.1} parent=1 // pred_region
      %52 = dma.done [#allocation3], 256
    $region21: #{tpu_custom_call.1} parent=1 // pred_fallthru
      _
    // Predicated region
    $region22: #{tpu_custom_call.1} parent=1 // pred_check
      _
    $region23: #{tpu_custom_call.1} parent=1 // pred_check_branch
      %54 = sbr.rel (0) target = $region25
    $region24: #{tpu_custom_call.1} parent=1 // pred_region
      %55 = dma.done [#allocation6], 256
    $region25: #{tpu_custom_call.1} parent=1 // pred_fallthru
      _
    // Predicated region
    $region26: #{tpu_custom_call.1} parent=1 // pred_check
      _
    $region27: #{tpu_custom_call.1} parent=1 // pred_check_branch
      %57 = sbr.rel (0) target = $region29
    $region28: #{tpu_custom_call.1} parent=1 // pred_region
      %58 = dma.done [#allocation6], 256
    $region29: #{tpu_custom_call.1} parent=1 // pred_fallthru
      _
    %v60 = vlaneseq
    %v61 = vshrl.u32 %v60, 7
    %v62 = vlaneseq
    %v63 = vand.u32 %v62, 127
    %vm64 = vcmp.ge.s32.totalorder %v61, %v63
    %v65 = vsel %vm64, 0.0, -1e+30
    %v66 = vld [vmem:[#allocation2] sm:$0xff]
    %v67 = vld [vmem:[#allocation2 + $0x8] sm:$0xff]
    %v68 = vpack.c.bf16 %v67, %v66
    %v69 = vld [vmem:[#allocation5] sm:$0xf]
    %v70 = vld [vmem:[#allocation5 + $0x4] sm:$0xf]
    %v71 = vld [vmem:[#allocation5 + $0x8] sm:$0xf]
    %v72 = vld [vmem:[#allocation5 + $0xc] sm:$0xf]
    %v77 = vunpack.c.l.b16 %v69
    %v78 = vunpack.c.l.b16 %v70
    %v79 = vunpack.c.l.b16 %v71
    %v80 = vunpack.c.l.b16 %v72
    %v81 = vpack.c.b16 %v78, %v77
    %v82 = vpack.c.b16 %v80, %v79
    %vm85 = vcmask 261120
    %v87 = vsel %vm85, %v68, 0
    %89 = vmatprep.subr.bf16.mxu0 0
    %90 = vmatpush1.bf16.msra.mxu0 %v81
    %91 = vmatprep.subr.bf16.mxu0 0
    %92 = vmatpush1.bf16.msra.mxu0 %v82
    %93 = vmatprep.subr.bf16.mxu0 0
    %94 = vmatpush1.bf16.msra.mxu0 0
    %95 = vmatprep.subr.bf16.mxu0 0
    %96 = vmatpush1.bf16.msra.mxu0 0
    %97 = vmatprep.subr.bf16.mxu0 0
    %98 = vmatpush1.bf16.msra.mxu0 0
    %99 = vmatprep.subr.bf16.mxu0 0
    %100 = vmatpush1.bf16.msra.mxu0 0
    %101 = vmatprep.subr.bf16.mxu0 0
    %102 = vmatpush1.bf16.msra.mxu0 0
    %103 = vmatprep.subr.bf16.mxu0 0
    %104 = vmatpush1.bf16.msra.mxu0 0
    %105 = vmatprep.subr.bf16.mxu0 0
    %106 = vmatpush1.bf16.msra.mxu0 0
    %107 = vmatprep.subr.bf16.mxu0 0
    %108 = vmatpush1.bf16.msra.mxu0 0
    %109 = vmatprep.subr.bf16.mxu0 0
    %110 = vmatpush1.bf16.msra.mxu0 0
    %111 = vmatprep.subr.bf16.mxu0 0
    %112 = vmatpush1.bf16.msra.mxu0 0
    %113 = vmatprep.subr.bf16.mxu0 0
    %114 = vmatpush1.bf16.msra.mxu0 0
    %115 = vmatprep.subr.bf16.mxu0 0
    %116 = vmatpush1.bf16.msra.mxu0 0
    %117 = vmatprep.subr.bf16.mxu0 0
    %118 = vmatpush1.bf16.msra.mxu0 0
    %119 = vmatprep.subr.bf16.mxu0 0
    %120 = vmatpush1.bf16.msra.mxu0 0
    %121 = vmatprep.mubr.bf16.mxu0 0
    %122 = vmatmul.mubr.bf16.gmra.mrb[0].mxu0 %v87
    %v123 = vpop.f32.mrb[0].mxu0
    %v124 = vadd.f32 0.0, %v123
    %v125 = vpop.f32.mrb[0].mxu0
    %v126 = vpop.f32.mrb[0].mxu0
    %v127 = vadd.f32 0.0, %v126
    %v128 = vpop.f32.mrb[0].mxu0
    %129 = vdwg.mxu0
    %v130 = vld [vmem:[#allocation7] sm:$0xf]
    %v131 = vld [vmem:[#allocation7 + $0x4] sm:$0xf]
    %v132 = vld [vmem:[#allocation7 + $0x8] sm:$0xf]
    %v133 = vld [vmem:[#allocation7 + $0xc] sm:$0xf]
    %v134 = vpack.c.bf16 %v124, %v124
    %v135 = vpack.c.bf16 %v127, %v127
    %vm136 = vcmask 64512
    %v138 = vsel %vm136, %v134, 0
    %140 = vmatprep.subr.bf16.mxu0 0
    %141 = vmatpush1.bf16.xpose.msra.mxu0 %v138
    %142 = vmatprep.subr.bf16.mxu0 0
    %143 = vmatpush1.bf16.xpose.msra.mxu0 0
    %144 = vmatprep.subr.bf16.mxu0 0
    %145 = vmatpush1.bf16.xpose.msra.mxu0 0
    %146 = vmatprep.subr.bf16.mxu0 0
    %147 = vmatpush1.bf16.xpose.msra.mxu0 0
    %148 = vmatprep.subr.bf16.mxu0 0
    %149 = vmatpush1.bf16.xpose.msra.mxu0 0
    %150 = vmatprep.subr.bf16.mxu0 0
    %151 = vmatpush1.bf16.xpose.msra.mxu0 0
    %152 = vmatprep.subr.bf16.mxu0 0
    %153 = vmatpush1.bf16.xpose.msra.mxu0 0
    %154 = vmatprep.subr.bf16.mxu0 0
    %155 = vmatpush1.bf16.xpose.msra.mxu0 0
    %156 = vmatprep.subr.bf16.mxu0 0
    %157 = vmatpush1.bf16.xpose.msra.mxu0 0
    %158 = vmatprep.subr.bf16.mxu0 0
    %159 = vmatpush1.bf16.xpose.msra.mxu0 0
    %160 = vmatprep.subr.bf16.mxu0 0
    %161 = vmatpush1.bf16.xpose.msra.mxu0 0
    %162 = vmatprep.subr.bf16.mxu0 0
    %163 = vmatpush1.bf16.xpose.msra.mxu0 0
    %164 = vmatprep.subr.bf16.mxu0 0
    %165 = vmatpush1.bf16.xpose.msra.mxu0 0
    %166 = vmatprep.subr.bf16.mxu0 0
    %167 = vmatpush1.bf16.xpose.msra.mxu0 0
    %168 = vmatprep.subr.bf16.mxu0 0
    %169 = vmatpush1.bf16.xpose.msra.mxu0 0
    %170 = vmatprep.subr.bf16.mxu0 0
    %171 = vmatpush1.bf16.xpose.msra.mxu0 0
    %172 = vmatprep.mubr.bf16.mxu0 0
    %173 = vmatmul.mubr.bf16.gmra.mrb[0].mxu0 %v138
    %v174 = vpop.f32.mrb[0].mxu0
    %v175 = vadd.f32 0.0, %v174
    %v176 = vpop.f32.mrb[0].mxu0
    %v177 = vpop.f32.mrb[0].mxu0
    %v178 = vpop.f32.mrb[0].mxu0
    %179 = vdwg.mxu0
    %v181 = vsel %vm136, %v135, 0
    %183 = vmatprep.subr.bf16.mxu0 0
    %184 = vmatpush1.bf16.xpose.msra.mxu0 %v181
    %185 = vmatprep.subr.bf16.mxu0 0
    %186 = vmatpush1.bf16.xpose.msra.mxu0 0
    %187 = vmatprep.subr.bf16.mxu0 0
    %188 = vmatpush1.bf16.xpose.msra.mxu0 0
    %189 = vmatprep.subr.bf16.mxu0 0
    %190 = vmatpush1.bf16.xpose.msra.mxu0 0
    %191 = vmatprep.subr.bf16.mxu0 0
    %192 = vmatpush1.bf16.xpose.msra.mxu0 0
    %193 = vmatprep.subr.bf16.mxu0 0
    %194 = vmatpush1.bf16.xpose.msra.mxu0 0
    %195 = vmatprep.subr.bf16.mxu0 0
    %196 = vmatpush1.bf16.xpose.msra.mxu0 0
    %197 = vmatprep.subr.bf16.mxu0 0
    %198 = vmatpush1.bf16.xpose.msra.mxu0 0
    %199 = vmatprep.subr.bf16.mxu0 0
    %200 = vmatpush1.bf16.xpose.msra.mxu0 0
    %201 = vmatprep.subr.bf16.mxu0 0
    %202 = vmatpush1.bf16.xpose.msra.mxu0 0
    %203 = vmatprep.subr.bf16.mxu0 0
    %204 = vmatpush1.bf16.xpose.msra.mxu0 0
    %205 = vmatprep.subr.bf16.mxu0 0
    %206 = vmatpush1.bf16.xpose.msra.mxu0 0
    %207 = vmatprep.subr.bf16.mxu0 0
    %208 = vmatpush1.bf16.xpose.msra.mxu0 0
    %209 = vmatprep.subr.bf16.mxu0 0
    %210 = vmatpush1.bf16.xpose.msra.mxu0 0
    %211 = vmatprep.subr.bf16.mxu0 0
    %212 = vmatpush1.bf16.xpose.msra.mxu0 0
    %213 = vmatprep.subr.bf16.mxu0 0
    %214 = vmatpush1.bf16.xpose.msra.mxu0 0
    %215 = vmatprep.mubr.bf16.mxu0 0
    %216 = vmatmul.mubr.bf16.gmra.mrb[0].mxu0 %v181
    %v217 = vpop.f32.mrb[0].mxu0
    %v218 = vadd.f32 0.0, %v217
    %v219 = vpop.f32.mrb[0].mxu0
    %v220 = vpop.f32.mrb[0].mxu0
    %v221 = vpop.f32.mrb[0].mxu0
    %222 = vdwg.mxu0
    %v223 = vmul.f32 %v175, 0.17677669
    %v224 = vmul.f32 %v218, 0.17677669
    %v225 = vadd.f32 %v223, %v65
    %v226 = vadd.f32 %v224, %v65
    %v227 = vsel %vm136, %v225, -inf
    %228 = vmax.xlane.f32.xlu0 %v227
    %v229 = vpop.xlane.xlu0 %228
    %v230 = vsel %vm136, %v226, -inf
    %231 = vmax.xlane.f32.xlu0 %v230
    %v232 = vpop.xlane.xlu0 %231
    %v233 = vsub.f32 %v225, %v229
    %v234 = vsub.f32 %v226, %v232
    %v235 = vmul.f32 %v233, 1.442695
    %v236 = vpow.pop %v235
    %v237 = vmul.f32 %v234, 1.442695
    %v238 = vpow.pop %v237
    %v239 = vsel %vm136, %v236, 0.0
    %240 = vadd.xlane.f32.xlu0 %v239
    %v241 = vpop.xlane.xlu0 %240
    %v242 = vsel %vm136, %v238, 0.0
    %243 = vadd.xlane.f32.xlu0 %v242
    %v244 = vpop.xlane.xlu0 %243
    %v245 = vrcp.pop %v241
    %v246 = vrcp.pop %v244
    %v247 = vmul.f32 %v236, %v245
    %v248 = vmul.f32 %v238, %v246
    %v249 = vpack.c.bf16 %v247, %v247
    %v250 = vpack.c.bf16 %v248, %v248
    %v252 = vsel %vm136, %v249, 0
    %vm254 = vcmask 1043456
    %v255 = vsel %vm254, %v134, 0
    %257 = vmatprep.subr.bf16.mxu0 0
    %258 = vmatpush1.bf16.msra.mxu0 %v255
    %259 = vmatprep.subr.bf16.mxu0 0
    %260 = vmatpush1.bf16.msra.mxu0 0
    %261 = vmatprep.subr.bf16.mxu0 0
    %262 = vmatpush1.bf16.msra.mxu0 0
    %263 = vmatprep.subr.bf16.mxu0 0
    %264 = vmatpush1.bf16.msra.mxu0 0
    %265 = vmatprep.subr.bf16.mxu0 0
    %266 = vmatpush1.bf16.msra.mxu0 0
    %267 = vmatprep.subr.bf16.mxu0 0
    %268 = vmatpush1.bf16.msra.mxu0 0
    %269 = vmatprep.subr.bf16.mxu0 0
    %270 = vmatpush1.bf16.msra.mxu0 0
    %271 = vmatprep.subr.bf16.mxu0 0
    %272 = vmatpush1.bf16.msra.mxu0 0
    %273 = vmatprep.subr.bf16.mxu0 0
    %274 = vmatpush1.bf16.msra.mxu0 0
    %275 = vmatprep.subr.bf16.mxu0 0
    %276 = vmatpush1.bf16.msra.mxu0 0
    %277 = vmatprep.subr.bf16.mxu0 0
    %278 = vmatpush1.bf16.msra.mxu0 0
    %279 = vmatprep.subr.bf16.mxu0 0
    %280 = vmatpush1.bf16.msra.mxu0 0
    %281 = vmatprep.subr.bf16.mxu0 0
    %282 = vmatpush1.bf16.msra.mxu0 0
    %283 = vmatprep.subr.bf16.mxu0 0
    %284 = vmatpush1.bf16.msra.mxu0 0
    %285 = vmatprep.subr.bf16.mxu0 0
    %286 = vmatpush1.bf16.msra.mxu0 0
    %287 = vmatprep.subr.bf16.mxu0 0
    %288 = vmatpush1.bf16.msra.mxu0 0
    %289 = vmatprep.mubr.bf16.mxu0 0
    %290 = vmatmul.mubr.bf16.gmra.mrb[0].mxu0 %v252
    %v291 = vpop.f32.mrb[0].mxu0
    %v292 = vadd.f32 0.0, %v291
    %v293 = vpop.f32.mrb[0].mxu0
    %v294 = vpop.f32.mrb[0].mxu0
    %v295 = vpop.f32.mrb[0].mxu0
    %296 = vdwg.mxu0
    %v298 = vsel %vm136, %v250, 0
    %v300 = vsel %vm254, %v135, 0
    %302 = vmatprep.subr.bf16.mxu0 0
    %303 = vmatpush1.bf16.msra.mxu0 %v300
    %304 = vmatprep.subr.bf16.mxu0 0
    %305 = vmatpush1.bf16.msra.mxu0 0
    %306 = vmatprep.subr.bf16.mxu0 0
    %307 = vmatpush1.bf16.msra.mxu0 0
    %308 = vmatprep.subr.bf16.mxu0 0
    %309 = vmatpush1.bf16.msra.mxu0 0
    %310 = vmatprep.subr.bf16.mxu0 0
    %311 = vmatpush1.bf16.msra.mxu0 0
    %312 = vmatprep.subr.bf16.mxu0 0
    %313 = vmatpush1.bf16.msra.mxu0 0
    %314 = vmatprep.subr.bf16.mxu0 0
    %315 = vmatpush1.bf16.msra.mxu0 0
    %316 = vmatprep.subr.bf16.mxu0 0
    %317 = vmatpush1.bf16.msra.mxu0 0
    %318 = vmatprep.subr.bf16.mxu0 0
    %319 = vmatpush1.bf16.msra.mxu0 0
    %320 = vmatprep.subr.bf16.mxu0 0
    %321 = vmatpush1.bf16.msra.mxu0 0
    %322 = vmatprep.subr.bf16.mxu0 0
    %323 = vmatpush1.bf16.msra.mxu0 0
    %324 = vmatprep.subr.bf16.mxu0 0
    %325 = vmatpush1.bf16.msra.mxu0 0
    %326 = vmatprep.subr.bf16.mxu0 0
    %327 = vmatpush1.bf16.msra.mxu0 0
    %328 = vmatprep.subr.bf16.mxu0 0
    %329 = vmatpush1.bf16.msra.mxu0 0
    %330 = vmatprep.subr.bf16.mxu0 0
    %331 = vmatpush1.bf16.msra.mxu0 0
    %332 = vmatprep.subr.bf16.mxu0 0
    %333 = vmatpush1.bf16.msra.mxu0 0
    %334 = vmatprep.mubr.bf16.mxu0 0
    %335 = vmatmul.mubr.bf16.gmra.mrb[0].mxu0 %v298
    %v336 = vpop.f32.mrb[0].mxu0
    %v337 = vadd.f32 0.0, %v336
    %v338 = vpop.f32.mrb[0].mxu0
    %v339 = vpop.f32.mrb[0].mxu0
    %v340 = vpop.f32.mrb[0].mxu0
    %341 = vdwg.mxu0
    %v342 = vpack.c.bf16 %v337, %v292
    %344 = vrot.lane.b32.xlu0 %v134, 120
    %v345 = vpop.permute.xlu0 %344
    %v347 = vsel %vm136, %v345, 0
    %349 = vmatprep.subr.bf16.mxu0 0
    %350 = vmatpush1.bf16.xpose.msra.mxu0 %v347
    %351 = vmatprep.subr.bf16.mxu0 0
    %352 = vmatpush1.bf16.xpose.msra.mxu0 0
    %353 = vmatprep.subr.bf16.mxu0 0
    %354 = vmatpush1.bf16.xpose.msra.mxu0 0
    %355 = vmatprep.subr.bf16.mxu0 0
    %356 = vmatpush1.bf16.xpose.msra.mxu0 0
    %357 = vmatprep.subr.bf16.mxu0 0
    %358 = vmatpush1.bf16.xpose.msra.mxu0 0
    %359 = vmatprep.subr.bf16.mxu0 0
    %360 = vmatpush1.bf16.xpose.msra.mxu0 0
    %361 = vmatprep.subr.bf16.mxu0 0
    %362 = vmatpush1.bf16.xpose.msra.mxu0 0
    %363 = vmatprep.subr.bf16.mxu0 0
    %364 = vmatpush1.bf16.xpose.msra.mxu0 0
    %365 = vmatprep.subr.bf16.mxu0 0
    %366 = vmatpush1.bf16.xpose.msra.mxu0 0
    %367 = vmatprep.subr.bf16.mxu0 0
    %368 = vmatpush1.bf16.xpose.msra.mxu0 0
    %369 = vmatprep.subr.bf16.mxu0 0
    %370 = vmatpush1.bf16.xpose.msra.mxu0 0
    %371 = vmatprep.subr.bf16.mxu0 0
    %372 = vmatpush1.bf16.xpose.msra.mxu0 0
    %373 = vmatprep.subr.bf16.mxu0 0
    %374 = vmatpush1.bf16.xpose.msra.mxu0 0
    %375 = vmatprep.subr.bf16.mxu0 0
    %376 = vmatpush1.bf16.xpose.msra.mxu0 0
    %377 = vmatprep.subr.bf16.mxu0 0
    %378 = vmatpush1.bf16.xpose.msra.mxu0 0
    %379 = vmatprep.subr.bf16.mxu0 0
    %380 = vmatpush1.bf16.xpose.msra.mxu0 0
    %381 = vmatprep.mubr.bf16.mxu0 0
    %382 = vmatmul.mubr.bf16.gmra.mrb[0].mxu0 %v347
    %v383 = vpop.f32.mrb[0].mxu0
    %v384 = vadd.f32 0.0, %v383
    %v385 = vpop.f32.mrb[0].mxu0
    %v386 = vpop.f32.mrb[0].mxu0
    %v387 = vpop.f32.mrb[0].mxu0
    %388 = vdwg.mxu0
    %390 = vrot.lane.b32.xlu0 %v135, 120
    %v391 = vpop.permute.xlu0 %390
    %v393 = vsel %vm136, %v391, 0
    %395 = vmatprep.subr.bf16.mxu0 0
    %396 = vmatpush1.bf16.xpose.msra.mxu0 %v393
    %397 = vmatprep.subr.bf16.mxu0 0
    %398 = vmatpush1.bf16.xpose.msra.mxu0 0
    %399 = vmatprep.subr.bf16.mxu0 0
    %400 = vmatpush1.bf16.xpose.msra.mxu0 0
    %401 = vmatprep.subr.bf16.mxu0 0
    %402 = vmatpush1.bf16.xpose.msra.mxu0 0
    %403 = vmatprep.subr.bf16.mxu0 0
    %404 = vmatpush1.bf16.xpose.msra.mxu0 0
    %405 = vmatprep.subr.bf16.mxu0 0
    %406 = vmatpush1.bf16.xpose.msra.mxu0 0
    %407 = vmatprep.subr.bf16.mxu0 0
    %408 = vmatpush1.bf16.xpose.msra.mxu0 0
    %409 = vmatprep.subr.bf16.mxu0 0
    %410 = vmatpush1.bf16.xpose.msra.mxu0 0
    %411 = vmatprep.subr.bf16.mxu0 0
    %412 = vmatpush1.bf16.xpose.msra.mxu0 0
    %413 = vmatprep.subr.bf16.mxu0 0
    %414 = vmatpush1.bf16.xpose.msra.mxu0 0
    %415 = vmatprep.subr.bf16.mxu0 0
    %416 = vmatpush1.bf16.xpose.msra.mxu0 0
    %417 = vmatprep.subr.bf16.mxu0 0
    %418 = vmatpush1.bf16.xpose.msra.mxu0 0
    %419 = vmatprep.subr.bf16.mxu0 0
    %420 = vmatpush1.bf16.xpose.msra.mxu0 0
    %421 = vmatprep.subr.bf16.mxu0 0
    %422 = vmatpush1.bf16.xpose.msra.mxu0 0
    %423 = vmatprep.subr.bf16.mxu0 0
    %424 = vmatpush1.bf16.xpose.msra.mxu0 0
    %425 = vmatprep.subr.bf16.mxu0 0
    %426 = vmatpush1.bf16.xpose.msra.mxu0 0
    %427 = vmatprep.mubr.bf16.mxu0 0
    %428 = vmatmul.mubr.bf16.gmra.mrb[0].mxu0 %v393
    %v429 = vpop.f32.mrb[0].mxu0
    %v430 = vadd.f32 0.0, %v429
    %v431 = vpop.f32.mrb[0].mxu0
    %v432 = vpop.f32.mrb[0].mxu0
    %v433 = vpop.f32.mrb[0].mxu0
    %434 = vdwg.mxu0
    %v435 = vmul.f32 %v384, 0.17677669
    %v436 = vmul.f32 %v430, 0.17677669
    %v437 = vadd.f32 %v435, %v65
    %v438 = vadd.f32 %v436, %v65
    %v439 = vsel %vm136, %v437, -inf
    %440 = vmax.xlane.f32.xlu0 %v439
    %v441 = vpop.xlane.xlu0 %440
    %v442 = vsel %vm136, %v438, -inf
    %443 = vmax.xlane.f32.xlu0 %v442
    %v444 = vpop.xlane.xlu0 %443
    %v445 = vsub.f32 %v437, %v441
    %v446 = vsub.f32 %v438, %v444
    %v447 = vmul.f32 %v445, 1.442695
    %v448 = vpow.pop %v447
    %v449 = vmul.f32 %v446, 1.442695
    %v450 = vpow.pop %v449
    %v451 = vsel %vm136, %v448, 0.0
    %452 = vadd.xlane.f32.xlu0 %v451
    %v453 = vpop.xlane.xlu0 %452
    %v454 = vsel %vm136, %v450, 0.0
    %455 = vadd.xlane.f32.xlu0 %v454
    %v456 = vpop.xlane.xlu0 %455
    %v457 = vrcp.pop %v453
    %v458 = vrcp.pop %v456
    %v459 = vmul.f32 %v448, %v457
    %v460 = vmul.f32 %v450, %v458
    %v461 = vpack.c.bf16 %v459, %v459
    %v462 = vpack.c.bf16 %v460, %v460
    %v464 = vsel %vm136, %v461, 0
    %v466 = vsel %vm254, %v345, 0
    %468 = vmatprep.subr.bf16.mxu0 0
    %469 = vmatpush1.bf16.msra.mxu0 %v466
    %470 = vmatprep.subr.bf16.mxu0 0
    %471 = vmatpush1.bf16.msra.mxu0 0
    %472 = vmatprep.subr.bf16.mxu0 0
    %473 = vmatpush1.bf16.msra.mxu0 0
    %474 = vmatprep.subr.bf16.mxu0 0
    %475 = vmatpush1.bf16.msra.mxu0 0
    %476 = vmatprep.subr.bf16.mxu0 0
    %477 = vmatpush1.bf16.msra.mxu0 0
    %478 = vmatprep.subr.bf16.mxu0 0
    %479 = vmatpush1.bf16.msra.mxu0 0
    %480 = vmatprep.subr.bf16.mxu0 0
    %481 = vmatpush1.bf16.msra.mxu0 0
    %482 = vmatprep.subr.bf16.mxu0 0
    %483 = vmatpush1.bf16.msra.mxu0 0
    %484 = vmatprep.subr.bf16.mxu0 0
    %485 = vmatpush1.bf16.msra.mxu0 0
    %486 = vmatprep.subr.bf16.mxu0 0
    %487 = vmatpush1.bf16.msra.mxu0 0
    %488 = vmatprep.subr.bf16.mxu0 0
    %489 = vmatpush1.bf16.msra.mxu0 0
    %490 = vmatprep.subr.bf16.mxu0 0
    %491 = vmatpush1.bf16.msra.mxu0 0
    %492 = vmatprep.subr.bf16.mxu0 0
    %493 = vmatpush1.bf16.msra.mxu0 0
    %494 = vmatprep.subr.bf16.mxu0 0
    %495 = vmatpush1.bf16.msra.mxu0 0
    %496 = vmatprep.subr.bf16.mxu0 0
    %497 = vmatpush1.bf16.msra.mxu0 0
    %498 = vmatprep.subr.bf16.mxu0 0
    %499 = vmatpush1.bf16.msra.mxu0 0
    %500 = vmatprep.mubr.bf16.mxu0 0
    %501 = vmatmul.mubr.bf16.gmra.mrb[0].mxu0 %v464
    %v502 = vpop.f32.mrb[0].mxu0
    %v503 = vadd.f32 0.0, %v502
    %v504 = vpop.f32.mrb[0].mxu0
    %v505 = vpop.f32.mrb[0].mxu0
    %v506 = vpop.f32.mrb[0].mxu0
    %507 = vdwg.mxu0
    %v509 = vsel %vm136, %v462, 0
    %v511 = vsel %vm254, %v391, 0
    %513 = vmatprep.subr.bf16.mxu0 0
    %514 = vmatpush1.bf16.msra.mxu0 %v511
    %515 = vmatprep.subr.bf16.mxu0 0
    %516 = vmatpush1.bf16.msra.mxu0 0
    %517 = vmatprep.subr.bf16.mxu0 0
    %518 = vmatpush1.bf16.msra.mxu0 0
    %519 = vmatprep.subr.bf16.mxu0 0
    %520 = vmatpush1.bf16.msra.mxu0 0
    %521 = vmatprep.subr.bf16.mxu0 0
    %522 = vmatpush1.bf16.msra.mxu0 0
    %523 = vmatprep.subr.bf16.mxu0 0
    %524 = vmatpush1.bf16.msra.mxu0 0
    %525 = vmatprep.subr.bf16.mxu0 0
    %526 = vmatpush1.bf16.msra.mxu0 0
    %527 = vmatprep.subr.bf16.mxu0 0
    %528 = vmatpush1.bf16.msra.mxu0 0
    %529 = vmatprep.subr.bf16.mxu0 0
    %530 = vmatpush1.bf16.msra.mxu0 0
    %531 = vmatprep.subr.bf16.mxu0 0
    %532 = vmatpush1.bf16.msra.mxu0 0
    %533 = vmatprep.subr.bf16.mxu0 0
    %534 = vmatpush1.bf16.msra.mxu0 0
    %535 = vmatprep.subr.bf16.mxu0 0
    %536 = vmatpush1.bf16.msra.mxu0 0
    %537 = vmatprep.subr.bf16.mxu0 0
    %538 = vmatpush1.bf16.msra.mxu0 0
    %539 = vmatprep.subr.bf16.mxu0 0
    %540 = vmatpush1.bf16.msra.mxu0 0
    %541 = vmatprep.subr.bf16.mxu0 0
    %542 = vmatpush1.bf16.msra.mxu0 0
    %543 = vmatprep.subr.bf16.mxu0 0
    %544 = vmatpush1.bf16.msra.mxu0 0
    %545 = vmatprep.mubr.bf16.mxu0 0
    %546 = vmatmul.mubr.bf16.gmra.mrb[0].mxu0 %v509
    %v547 = vpop.f32.mrb[0].mxu0
    %v548 = vadd.f32 0.0, %v547
    %v549 = vpop.f32.mrb[0].mxu0
    %v550 = vpop.f32.mrb[0].mxu0
    %v551 = vpop.f32.mrb[0].mxu0
    %552 = vdwg.mxu0
    %v553 = vpack.c.bf16 %v548, %v503
    %v555 = vsel %vm136, %v553, 0
    %v558 = vsel %vm254, %v131, 0
    %560 = vmatprep.subr.bf16.mxu0 0
    %561 = vmatpush1.bf16.msra.mxu0 %v558
    %562 = vmatprep.subr.bf16.mxu0 0
    %563 = vmatpush1.bf16.msra.mxu0 0
    %564 = vmatprep.subr.bf16.mxu0 0
    %565 = vmatpush1.bf16.msra.mxu0 0
    %566 = vmatprep.subr.bf16.mxu0 0
    %567 = vmatpush1.bf16.msra.mxu0 0
    %568 = vmatprep.subr.bf16.mxu0 0
    %569 = vmatpush1.bf16.msra.mxu0 0
    %570 = vmatprep.subr.bf16.mxu0 0
    %571 = vmatpush1.bf16.msra.mxu0 0
    %572 = vmatprep.subr.bf16.mxu0 0
    %573 = vmatpush1.bf16.msra.mxu0 0
    %574 = vmatprep.subr.bf16.mxu0 0
    %575 = vmatpush1.bf16.msra.mxu0 0
    %576 = vmatprep.subr.bf16.mxu0 0
    %577 = vmatpush1.bf16.msra.mxu0 0
    %578 = vmatprep.subr.bf16.mxu0 0
    %579 = vmatpush1.bf16.msra.mxu0 0
    %580 = vmatprep.subr.bf16.mxu0 0
    %581 = vmatpush1.bf16.msra.mxu0 0
    %582 = vmatprep.subr.bf16.mxu0 0
    %583 = vmatpush1.bf16.msra.mxu0 0
    %584 = vmatprep.subr.bf16.mxu0 0
    %585 = vmatpush1.bf16.msra.mxu0 0
    %586 = vmatprep.subr.bf16.mxu0 0
    %587 = vmatpush1.bf16.msra.mxu0 0
    %588 = vmatprep.subr.bf16.mxu0 0
    %589 = vmatpush1.bf16.msra.mxu0 0
    %590 = vmatprep.subr.bf16.mxu0 0
    %591 = vmatpush1.bf16.msra.mxu0 0
    %592 = vmatprep.mubr.bf16.mxu0 0
    %593 = vmatmul.mubr.bf16.gmra.mrb[0].mxu0 %v555
    %v594 = vpop.f32.mrb[0].mxu0
    %v595 = vadd.f32 0.0, %v594
    %v596 = vpop.f32.mrb[0].mxu0
    %v597 = vpop.f32.mrb[0].mxu0
    %v598 = vadd.f32 0.0, %v597
    %v599 = vpop.f32.mrb[0].mxu0
    %600 = vdwg.mxu0
    %v602 = vsel %vm136, %v342, 0
    %v605 = vsel %vm254, %v130, 0
    %607 = vmatprep.subr.bf16.mxu0 0
    %608 = vmatpush1.bf16.msra.mxu0 %v605
    %609 = vmatprep.subr.bf16.mxu0 0
    %610 = vmatpush1.bf16.msra.mxu0 0
    %611 = vmatprep.subr.bf16.mxu0 0
    %612 = vmatpush1.bf16.msra.mxu0 0
    %613 = vmatprep.subr.bf16.mxu0 0
    %614 = vmatpush1.bf16.msra.mxu0 0
    %615 = vmatprep.subr.bf16.mxu0 0
    %616 = vmatpush1.bf16.msra.mxu0 0
    %617 = vmatprep.subr.bf16.mxu0 0
    %618 = vmatpush1.bf16.msra.mxu0 0
    %619 = vmatprep.subr.bf16.mxu0 0
    %620 = vmatpush1.bf16.msra.mxu0 0
    %621 = vmatprep.subr.bf16.mxu0 0
    %622 = vmatpush1.bf16.msra.mxu0 0
    %623 = vmatprep.subr.bf16.mxu0 0
    %624 = vmatpush1.bf16.msra.mxu0 0
    %625 = vmatprep.subr.bf16.mxu0 0
    %626 = vmatpush1.bf16.msra.mxu0 0
    %627 = vmatprep.subr.bf16.mxu0 0
    %628 = vmatpush1.bf16.msra.mxu0 0
    %629 = vmatprep.subr.bf16.mxu0 0
    %630 = vmatpush1.bf16.msra.mxu0 0
    %631 = vmatprep.subr.bf16.mxu0 0
    %632 = vmatpush1.bf16.msra.mxu0 0
    %633 = vmatprep.subr.bf16.mxu0 0
    %634 = vmatpush1.bf16.msra.mxu0 0
    %635 = vmatprep.subr.bf16.mxu0 0
    %636 = vmatpush1.bf16.msra.mxu0 0
    %637 = vmatprep.subr.bf16.mxu0 0
    %638 = vmatpush1.bf16.msra.mxu0 0
    %639 = vmatprep.mubr.bf16.mxu0 0
    %640 = vmatmul.mubr.bf16.gmra.mrb[0].mxu0 %v602
    %v641 = vpop.f32.mrb[0].mxu0
    %v642 = vadd.f32 %v595, %v641
    %v643 = vpop.f32.mrb[0].mxu0
    %v644 = vpop.f32.mrb[0].mxu0
    %v645 = vadd.f32 %v598, %v644
    %v646 = vpop.f32.mrb[0].mxu0
    %647 = vdwg.mxu0
    %648 = vrot.lane.b32.xlu0 %v134, 112
    %v649 = vpop.permute.xlu0 %648
    %v651 = vsel %vm136, %v649, 0
    %653 = vmatprep.subr.bf16.mxu0 0
    %654 = vmatpush1.bf16.xpose.msra.mxu0 %v651
    %655 = vmatprep.subr.bf16.mxu0 0
    %656 = vmatpush1.bf16.xpose.msra.mxu0 0
    %657 = vmatprep.subr.bf16.mxu0 0
    %658 = vmatpush1.bf16.xpose.msra.mxu0 0
    %659 = vmatprep.subr.bf16.mxu0 0
    %660 = vmatpush1.bf16.xpose.msra.mxu0 0
    %661 = vmatprep.subr.bf16.mxu0 0
    %662 = vmatpush1.bf16.xpose.msra.mxu0 0
    %663 = vmatprep.subr.bf16.mxu0 0
    %664 = vmatpush1.bf16.xpose.msra.mxu0 0
    %665 = vmatprep.subr.bf16.mxu0 0
    %666 = vmatpush1.bf16.xpose.msra.mxu0 0
    %667 = vmatprep.subr.bf16.mxu0 0
    %668 = vmatpush1.bf16.xpose.msra.mxu0 0
    %669 = vmatprep.subr.bf16.mxu0 0
    %670 = vmatpush1.bf16.xpose.msra.mxu0 0
    %671 = vmatprep.subr.bf16.mxu0 0
    %672 = vmatpush1.bf16.xpose.msra.mxu0 0
    %673 = vmatprep.subr.bf16.mxu0 0
    %674 = vmatpush1.bf16.xpose.msra.mxu0 0
    %675 = vmatprep.subr.bf16.mxu0 0
    %676 = vmatpush1.bf16.xpose.msra.mxu0 0
    %677 = vmatprep.subr.bf16.mxu0 0
    %678 = vmatpush1.bf16.xpose.msra.mxu0 0
    %679 = vmatprep.subr.bf16.mxu0 0
    %680 = vmatpush1.bf16.xpose.msra.mxu0 0
    %681 = vmatprep.subr.bf16.mxu0 0
    %682 = vmatpush1.bf16.xpose.msra.mxu0 0
    %683 = vmatprep.subr.bf16.mxu0 0
    %684 = vmatpush1.bf16.xpose.msra.mxu0 0
    %685 = vmatprep.mubr.bf16.mxu0 0
    %686 = vmatmul.mubr.bf16.gmra.mrb[0].mxu0 %v651
    %v687 = vpop.f32.mrb[0].mxu0
    %v688 = vadd.f32 0.0, %v687
    %v689 = vpop.f32.mrb[0].mxu0
    %v690 = vpop.f32.mrb[0].mxu0
    %v691 = vpop.f32.mrb[0].mxu0
    %692 = vdwg.mxu0
    %693 = vrot.lane.b32.xlu0 %v135, 112
    %v694 = vpop.permute.xlu0 %693
    %v696 = vsel %vm136, %v694, 0
    %698 = vmatprep.subr.bf16.mxu0 0
    %699 = vmatpush1.bf16.xpose.msra.mxu0 %v696
    %700 = vmatprep.subr.bf16.mxu0 0
    %701 = vmatpush1.bf16.xpose.msra.mxu0 0
    %702 = vmatprep.subr.bf16.mxu0 0
    %703 = vmatpush1.bf16.xpose.msra.mxu0 0
    %704 = vmatprep.subr.bf16.mxu0 0
    %705 = vmatpush1.bf16.xpose.msra.mxu0 0
    %706 = vmatprep.subr.bf16.mxu0 0
    %707 = vmatpush1.bf16.xpose.msra.mxu0 0
    %708 = vmatprep.subr.bf16.mxu0 0
    %709 = vmatpush1.bf16.xpose.msra.mxu0 0
    %710 = vmatprep.subr.bf16.mxu0 0
    %711 = vmatpush1.bf16.xpose.msra.mxu0 0
    %712 = vmatprep.subr.bf16.mxu0 0
    %713 = vmatpush1.bf16.xpose.msra.mxu0 0
    %714 = vmatprep.subr.bf16.mxu0 0
    %715 = vmatpush1.bf16.xpose.msra.mxu0 0
    %716 = vmatprep.subr.bf16.mxu0 0
    %717 = vmatpush1.bf16.xpose.msra.mxu0 0
    %718 = vmatprep.subr.bf16.mxu0 0
    %719 = vmatpush1.bf16.xpose.msra.mxu0 0
    %720 = vmatprep.subr.bf16.mxu0 0
    %721 = vmatpush1.bf16.xpose.msra.mxu0 0
    %722 = vmatprep.subr.bf16.mxu0 0
    %723 = vmatpush1.bf16.xpose.msra.mxu0 0
    %724 = vmatprep.subr.bf16.mxu0 0
    %725 = vmatpush1.bf16.xpose.msra.mxu0 0
    %726 = vmatprep.subr.bf16.mxu0 0
    %727 = vmatpush1.bf16.xpose.msra.mxu0 0
    %728 = vmatprep.subr.bf16.mxu0 0
    %729 = vmatpush1.bf16.xpose.msra.mxu0 0
    %730 = vmatprep.mubr.bf16.mxu0 0
    %731 = vmatmul.mubr.bf16.gmra.mrb[0].mxu0 %v696
    %v732 = vpop.f32.mrb[0].mxu0
    %v733 = vadd.f32 0.0, %v732
    %v734 = vpop.f32.mrb[0].mxu0
    %v735 = vpop.f32.mrb[0].mxu0
    %v736 = vpop.f32.mrb[0].mxu0
    %737 = vdwg.mxu0
    %v738 = vmul.f32 %v688, 0.17677669
    %v739 = vmul.f32 %v733, 0.17677669
    %v740 = vadd.f32 %v738, %v65
    %v741 = vadd.f32 %v739, %v65
    %v742 = vsel %vm136, %v740, -inf
    %743 = vmax.xlane.f32.xlu0 %v742
    %v744 = vpop.xlane.xlu0 %743
    %v745 = vsel %vm136, %v741, -inf
    %746 = vmax.xlane.f32.xlu0 %v745
    %v747 = vpop.xlane.xlu0 %746
    %v748 = vsub.f32 %v740, %v744
    %v749 = vsub.f32 %v741, %v747
    %v750 = vmul.f32 %v748, 1.442695
    %v751 = vpow.pop %v750
    %v752 = vmul.f32 %v749, 1.442695
    %v753 = vpow.pop %v752
    %v754 = vsel %vm136, %v751, 0.0
    %755 = vadd.xlane.f32.xlu0 %v754
    %v756 = vpop.xlane.xlu0 %755
    %v757 = vsel %vm136, %v753, 0.0
    %758 = vadd.xlane.f32.xlu0 %v757
    %v759 = vpop.xlane.xlu0 %758
    %v760 = vrcp.pop %v756
    %v761 = vrcp.pop %v759
    %v762 = vmul.f32 %v751, %v760
    %v763 = vmul.f32 %v753, %v761
    %v764 = vpack.c.bf16 %v762, %v762
    %v765 = vpack.c.bf16 %v763, %v763
    %v767 = vsel %vm136, %v764, 0
    %v769 = vsel %vm254, %v649, 0
    %771 = vmatprep.subr.bf16.mxu0 0
    %772 = vmatpush1.bf16.msra.mxu0 %v769
    %773 = vmatprep.subr.bf16.mxu0 0
    %774 = vmatpush1.bf16.msra.mxu0 0
    %775 = vmatprep.subr.bf16.mxu0 0
    %776 = vmatpush1.bf16.msra.mxu0 0
    %777 = vmatprep.subr.bf16.mxu0 0
    %778 = vmatpush1.bf16.msra.mxu0 0
    %779 = vmatprep.subr.bf16.mxu0 0
    %780 = vmatpush1.bf16.msra.mxu0 0
    %781 = vmatprep.subr.bf16.mxu0 0
    %782 = vmatpush1.bf16.msra.mxu0 0
    %783 = vmatprep.subr.bf16.mxu0 0
    %784 = vmatpush1.bf16.msra.mxu0 0
    %785 = vmatprep.subr.bf16.mxu0 0
    %786 = vmatpush1.bf16.msra.mxu0 0
    %787 = vmatprep.subr.bf16.mxu0 0
    %788 = vmatpush1.bf16.msra.mxu0 0
    %789 = vmatprep.subr.bf16.mxu0 0
    %790 = vmatpush1.bf16.msra.mxu0 0
    %791 = vmatprep.subr.bf16.mxu0 0
    %792 = vmatpush1.bf16.msra.mxu0 0
    %793 = vmatprep.subr.bf16.mxu0 0
    %794 = vmatpush1.bf16.msra.mxu0 0
    %795 = vmatprep.subr.bf16.mxu0 0
    %796 = vmatpush1.bf16.msra.mxu0 0
    %797 = vmatprep.subr.bf16.mxu0 0
    %798 = vmatpush1.bf16.msra.mxu0 0
    %799 = vmatprep.subr.bf16.mxu0 0
    %800 = vmatpush1.bf16.msra.mxu0 0
    %801 = vmatprep.subr.bf16.mxu0 0
    %802 = vmatpush1.bf16.msra.mxu0 0
    %803 = vmatprep.mubr.bf16.mxu0 0
    %804 = vmatmul.mubr.bf16.gmra.mrb[0].mxu0 %v767
    %v805 = vpop.f32.mrb[0].mxu0
    %v806 = vadd.f32 0.0, %v805
    %v807 = vpop.f32.mrb[0].mxu0
    %v808 = vpop.f32.mrb[0].mxu0
    %v809 = vpop.f32.mrb[0].mxu0
    %810 = vdwg.mxu0
    %v812 = vsel %vm136, %v765, 0
    %v814 = vsel %vm254, %v694, 0
    %816 = vmatprep.subr.bf16.mxu0 0
    %817 = vmatpush1.bf16.msra.mxu0 %v814
    %818 = vmatprep.subr.bf16.mxu0 0
    %819 = vmatpush1.bf16.msra.mxu0 0
    %820 = vmatprep.subr.bf16.mxu0 0
    %821 = vmatpush1.bf16.msra.mxu0 0
    %822 = vmatprep.subr.bf16.mxu0 0
    %823 = vmatpush1.bf16.msra.mxu0 0
    %824 = vmatprep.subr.bf16.mxu0 0
    %825 = vmatpush1.bf16.msra.mxu0 0
    %826 = vmatprep.subr.bf16.mxu0 0
    %827 = vmatpush1.bf16.msra.mxu0 0
    %828 = vmatprep.subr.bf16.mxu0 0
    %829 = vmatpush1.bf16.msra.mxu0 0
    %830 = vmatprep.subr.bf16.mxu0 0
    %831 = vmatpush1.bf16.msra.mxu0 0
    %832 = vmatprep.subr.bf16.mxu0 0
    %833 = vmatpush1.bf16.msra.mxu0 0
    %834 = vmatprep.subr.bf16.mxu0 0
    %835 = vmatpush1.bf16.msra.mxu0 0
    %836 = vmatprep.subr.bf16.mxu0 0
    %837 = vmatpush1.bf16.msra.mxu0 0
    %838 = vmatprep.subr.bf16.mxu0 0
    %839 = vmatpush1.bf16.msra.mxu0 0
    %840 = vmatprep.subr.bf16.mxu0 0
    %841 = vmatpush1.bf16.msra.mxu0 0
    %842 = vmatprep.subr.bf16.mxu0 0
    %843 = vmatpush1.bf16.msra.mxu0 0
    %844 = vmatprep.subr.bf16.mxu0 0
    %845 = vmatpush1.bf16.msra.mxu0 0
    %846 = vmatprep.subr.bf16.mxu0 0
    %847 = vmatpush1.bf16.msra.mxu0 0
    %848 = vmatprep.mubr.bf16.mxu0 0
    %849 = vmatmul.mubr.bf16.gmra.mrb[0].mxu0 %v812
    %v850 = vpop.f32.mrb[0].mxu0
    %v851 = vadd.f32 0.0, %v850
    %v852 = vpop.f32.mrb[0].mxu0
    %v853 = vpop.f32.mrb[0].mxu0
    %v854 = vpop.f32.mrb[0].mxu0
    %855 = vdwg.mxu0
    %v856 = vpack.c.bf16 %v851, %v806
    %v858 = vsel %vm136, %v856, 0
    %v861 = vsel %vm254, %v132, 0
    %863 = vmatprep.subr.bf16.mxu0 0
    %864 = vmatpush1.bf16.msra.mxu0 %v861
    %865 = vmatprep.subr.bf16.mxu0 0
    %866 = vmatpush1.bf16.msra.mxu0 0
    %867 = vmatprep.subr.bf16.mxu0 0
    %868 = vmatpush1.bf16.msra.mxu0 0
    %869 = vmatprep.subr.bf16.mxu0 0
    %870 = vmatpush1.bf16.msra.mxu0 0
    %871 = vmatprep.subr.bf16.mxu0 0
    %872 = vmatpush1.bf16.msra.mxu0 0
    %873 = vmatprep.subr.bf16.mxu0 0
    %874 = vmatpush1.bf16.msra.mxu0 0
    %875 = vmatprep.subr.bf16.mxu0 0
    %876 = vmatpush1.bf16.msra.mxu0 0
    %877 = vmatprep.subr.bf16.mxu0 0
    %878 = vmatpush1.bf16.msra.mxu0 0
    %879 = vmatprep.subr.bf16.mxu0 0
    %880 = vmatpush1.bf16.msra.mxu0 0
    %881 = vmatprep.subr.bf16.mxu0 0
    %882 = vmatpush1.bf16.msra.mxu0 0
    %883 = vmatprep.subr.bf16.mxu0 0
    %884 = vmatpush1.bf16.msra.mxu0 0
    %885 = vmatprep.subr.bf16.mxu0 0
    %886 = vmatpush1.bf16.msra.mxu0 0
    %887 = vmatprep.subr.bf16.mxu0 0
    %888 = vmatpush1.bf16.msra.mxu0 0
    %889 = vmatprep.subr.bf16.mxu0 0
    %890 = vmatpush1.bf16.msra.mxu0 0
    %891 = vmatprep.subr.bf16.mxu0 0
    %892 = vmatpush1.bf16.msra.mxu0 0
    %893 = vmatprep.subr.bf16.mxu0 0
    %894 = vmatpush1.bf16.msra.mxu0 0
    %895 = vmatprep.mubr.bf16.mxu0 0
    %896 = vmatmul.mubr.bf16.gmra.mrb[0].mxu0 %v858
    %v897 = vpop.f32.mrb[0].mxu0
    %v898 = vadd.f32 0.0, %v897
    %v899 = vpop.f32.mrb[0].mxu0
    %v900 = vpop.f32.mrb[0].mxu0
    %v901 = vadd.f32 0.0, %v900
    %v902 = vpop.f32.mrb[0].mxu0
    %903 = vdwg.mxu0
    %v904 = vadd.f32 %v642, %v898
    %v905 = vadd.f32 %v645, %v901
    %906 = vrot.lane.b32.xlu0 %v134, 104
    %v907 = vpop.permute.xlu0 %906
    %v909 = vsel %vm136, %v907, 0
    %911 = vmatprep.subr.bf16.mxu0 0
    %912 = vmatpush1.bf16.xpose.msra.mxu0 %v909
    %913 = vmatprep.subr.bf16.mxu0 0
    %914 = vmatpush1.bf16.xpose.msra.mxu0 0
    %915 = vmatprep.subr.bf16.mxu0 0
    %916 = vmatpush1.bf16.xpose.msra.mxu0 0
    %917 = vmatprep.subr.bf16.mxu0 0
    %918 = vmatpush1.bf16.xpose.msra.mxu0 0
    %919 = vmatprep.subr.bf16.mxu0 0
    %920 = vmatpush1.bf16.xpose.msra.mxu0 0
    %921 = vmatprep.subr.bf16.mxu0 0
    %922 = vmatpush1.bf16.xpose.msra.mxu0 0
    %923 = vmatprep.subr.bf16.mxu0 0
    %924 = vmatpush1.bf16.xpose.msra.mxu0 0
    %925 = vmatprep.subr.bf16.mxu0 0
    %926 = vmatpush1.bf16.xpose.msra.mxu0 0
    %927 = vmatprep.subr.bf16.mxu0 0
    %928 = vmatpush1.bf16.xpose.msra.mxu0 0
    %929 = vmatprep.subr.bf16.mxu0 0
    %930 = vmatpush1.bf16.xpose.msra.mxu0 0
    %931 = vmatprep.subr.bf16.mxu0 0
    %932 = vmatpush1.bf16.xpose.msra.mxu0 0
    %933 = vmatprep.subr.bf16.mxu0 0
    %934 = vmatpush1.bf16.xpose.msra.mxu0 0
    %935 = vmatprep.subr.bf16.mxu0 0
    %936 = vmatpush1.bf16.xpose.msra.mxu0 0
    %937 = vmatprep.subr.bf16.mxu0 0
    %938 = vmatpush1.bf16.xpose.msra.mxu0 0
    %939 = vmatprep.subr.bf16.mxu0 0
    %940 = vmatpush1.bf16.xpose.msra.mxu0 0
    %941 = vmatprep.subr.bf16.mxu0 0
    %942 = vmatpush1.bf16.xpose.msra.mxu0 0
    %943 = vmatprep.mubr.bf16.mxu0 0
    %944 = vmatmul.mubr.bf16.gmra.mrb[0].mxu0 %v909
    %v945 = vpop.f32.mrb[0].mxu0
    %v946 = vadd.f32 0.0, %v945
    %v947 = vpop.f32.mrb[0].mxu0
    %v948 = vpop.f32.mrb[0].mxu0
    %v949 = vpop.f32.mrb[0].mxu0
    %950 = vdwg.mxu0
    %951 = vrot.lane.b32.xlu0 %v135, 104
    %v952 = vpop.permute.xlu0 %951
    %v954 = vsel %vm136, %v952, 0
    %956 = vmatprep.subr.bf16.mxu0 0
    %957 = vmatpush1.bf16.xpose.msra.mxu0 %v954
    %958 = vmatprep.subr.bf16.mxu0 0
    %959 = vmatpush1.bf16.xpose.msra.mxu0 0
    %960 = vmatprep.subr.bf16.mxu0 0
    %961 = vmatpush1.bf16.xpose.msra.mxu0 0
    %962 = vmatprep.subr.bf16.mxu0 0
    %963 = vmatpush1.bf16.xpose.msra.mxu0 0
    %964 = vmatprep.subr.bf16.mxu0 0
    %965 = vmatpush1.bf16.xpose.msra.mxu0 0
    %966 = vmatprep.subr.bf16.mxu0 0
    %967 = vmatpush1.bf16.xpose.msra.mxu0 0
    %968 = vmatprep.subr.bf16.mxu0 0
    %969 = vmatpush1.bf16.xpose.msra.mxu0 0
    %970 = vmatprep.subr.bf16.mxu0 0
    %971 = vmatpush1.bf16.xpose.msra.mxu0 0
    %972 = vmatprep.subr.bf16.mxu0 0
    %973 = vmatpush1.bf16.xpose.msra.mxu0 0
    %974 = vmatprep.subr.bf16.mxu0 0
    %975 = vmatpush1.bf16.xpose.msra.mxu0 0
    %976 = vmatprep.subr.bf16.mxu0 0
    %977 = vmatpush1.bf16.xpose.msra.mxu0 0
    %978 = vmatprep.subr.bf16.mxu0 0
    %979 = vmatpush1.bf16.xpose.msra.mxu0 0
    %980 = vmatprep.subr.bf16.mxu0 0
    %981 = vmatpush1.bf16.xpose.msra.mxu0 0
    %982 = vmatprep.subr.bf16.mxu0 0
    %983 = vmatpush1.bf16.xpose.msra.mxu0 0
    %984 = vmatprep.subr.bf16.mxu0 0
    %985 = vmatpush1.bf16.xpose.msra.mxu0 0
    %986 = vmatprep.subr.bf16.mxu0 0
    %987 = vmatpush1.bf16.xpose.msra.mxu0 0
    %988 = vmatprep.mubr.bf16.mxu0 0
    %989 = vmatmul.mubr.bf16.gmra.mrb[0].mxu0 %v954
    %v990 = vpop.f32.mrb[0].mxu0
    %v991 = vadd.f32 0.0, %v990
    %v992 = vpop.f32.mrb[0].mxu0
    %v993 = vpop.f32.mrb[0].mxu0
    %v994 = vpop.f32.mrb[0].mxu0
    %995 = vdwg.mxu0
    %v996 = vmul.f32 %v946, 0.17677669
    %v997 = vmul.f32 %v991, 0.17677669
    %v998 = vadd.f32 %v996, %v65
    %v999 = vadd.f32 %v997, %v65
    %v1000 = vsel %vm136, %v998, -inf
    %1001 = vmax.xlane.f32.xlu0 %v1000
    %v1002 = vpop.xlane.xlu0 %1001
    %v1003 = vsel %vm136, %v999, -inf
    %1004 = vmax.xlane.f32.xlu0 %v1003
    %v1005 = vpop.xlane.xlu0 %1004
    %v1006 = vsub.f32 %v998, %v1002
    %v1007 = vsub.f32 %v999, %v1005
    %v1008 = vmul.f32 %v1006, 1.442695
    %v1009 = vpow.pop %v1008
    %v1010 = vmul.f32 %v1007, 1.442695
    %v1011 = vpow.pop %v1010
    %v1012 = vsel %vm136, %v1009, 0.0
    %1013 = vadd.xlane.f32.xlu0 %v1012
    %v1014 = vpop.xlane.xlu0 %1013
    %v1015 = vsel %vm136, %v1011, 0.0
    %1016 = vadd.xlane.f32.xlu0 %v1015
    %v1017 = vpop.xlane.xlu0 %1016
    %v1018 = vrcp.pop %v1014
    %v1019 = vrcp.pop %v1017
    %v1020 = vmul.f32 %v1009, %v1018
    %v1021 = vmul.f32 %v1011, %v1019
    %v1022 = vpack.c.bf16 %v1020, %v1020
    %v1023 = vpack.c.bf16 %v1021, %v1021
    %v1025 = vsel %vm136, %v1022, 0
    %v1027 = vsel %vm254, %v907, 0
    %1029 = vmatprep.subr.bf16.mxu0 0
    %1030 = vmatpush1.bf16.msra.mxu0 %v1027
    %1031 = vmatprep.subr.bf16.mxu0 0
    %1032 = vmatpush1.bf16.msra.mxu0 0
    %1033 = vmatprep.subr.bf16.mxu0 0
    %1034 = vmatpush1.bf16.msra.mxu0 0
    %1035 = vmatprep.subr.bf16.mxu0 0
    %1036 = vmatpush1.bf16.msra.mxu0 0
    %1037 = vmatprep.subr.bf16.mxu0 0
    %1038 = vmatpush1.bf16.msra.mxu0 0
    %1039 = vmatprep.subr.bf16.mxu0 0
    %1040 = vmatpush1.bf16.msra.mxu0 0
    %1041 = vmatprep.subr.bf16.mxu0 0
    %1042 = vmatpush1.bf16.msra.mxu0 0
    %1043 = vmatprep.subr.bf16.mxu0 0
    %1044 = vmatpush1.bf16.msra.mxu0 0
    %1045 = vmatprep.subr.bf16.mxu0 0
    %1046 = vmatpush1.bf16.msra.mxu0 0
    %1047 = vmatprep.subr.bf16.mxu0 0
    %1048 = vmatpush1.bf16.msra.mxu0 0
    %1049 = vmatprep.subr.bf16.mxu0 0
    %1050 = vmatpush1.bf16.msra.mxu0 0
    %1051 = vmatprep.subr.bf16.mxu0 0
    %1052 = vmatpush1.bf16.msra.mxu0 0
    %1053 = vmatprep.subr.bf16.mxu0 0
    %1054 = vmatpush1.bf16.msra.mxu0 0
    %1055 = vmatprep.subr.bf16.mxu0 0
    %1056 = vmatpush1.bf16.msra.mxu0 0
    %1057 = vmatprep.subr.bf16.mxu0 0
    %1058 = vmatpush1.bf16.msra.mxu0 0
    %1059 = vmatprep.subr.bf16.mxu0 0
    %1060 = vmatpush1.bf16.msra.mxu0 0
    %1061 = vmatprep.mubr.bf16.mxu0 0
    %1062 = vmatmul.mubr.bf16.gmra.mrb[0].mxu0 %v1025
    %v1063 = vpop.f32.mrb[0].mxu0
    %v1064 = vadd.f32 0.0, %v1063
    %v1065 = vpop.f32.mrb[0].mxu0
    %v1066 = vpop.f32.mrb[0].mxu0
    %v1067 = vpop.f32.mrb[0].mxu0
    %1068 = vdwg.mxu0
    %v1070 = vsel %vm136, %v1023, 0
    %v1072 = vsel %vm254, %v952, 0
    %1074 = vmatprep.subr.bf16.mxu0 0
    %1075 = vmatpush1.bf16.msra.mxu0 %v1072
    %1076 = vmatprep.subr.bf16.mxu0 0
    %1077 = vmatpush1.bf16.msra.mxu0 0
    %1078 = vmatprep.subr.bf16.mxu0 0
    %1079 = vmatpush1.bf16.msra.mxu0 0
    %1080 = vmatprep.subr.bf16.mxu0 0
    %1081 = vmatpush1.bf16.msra.mxu0 0
    %1082 = vmatprep.subr.bf16.mxu0 0
    %1083 = vmatpush1.bf16.msra.mxu0 0
    %1084 = vmatprep.subr.bf16.mxu0 0
    %1085 = vmatpush1.bf16.msra.mxu0 0
    %1086 = vmatprep.subr.bf16.mxu0 0
    %1087 = vmatpush1.bf16.msra.mxu0 0
    %1088 = vmatprep.subr.bf16.mxu0 0
    %1089 = vmatpush1.bf16.msra.mxu0 0
    %1090 = vmatprep.subr.bf16.mxu0 0
    %1091 = vmatpush1.bf16.msra.mxu0 0
    %1092 = vmatprep.subr.bf16.mxu0 0
    %1093 = vmatpush1.bf16.msra.mxu0 0
    %1094 = vmatprep.subr.bf16.mxu0 0
    %1095 = vmatpush1.bf16.msra.mxu0 0
    %1096 = vmatprep.subr.bf16.mxu0 0
    %1097 = vmatpush1.bf16.msra.mxu0 0
    %1098 = vmatprep.subr.bf16.mxu0 0
    %1099 = vmatpush1.bf16.msra.mxu0 0
    %1100 = vmatprep.subr.bf16.mxu0 0
    %1101 = vmatpush1.bf16.msra.mxu0 0
    %1102 = vmatprep.subr.bf16.mxu0 0
    %1103 = vmatpush1.bf16.msra.mxu0 0
    %1104 = vmatprep.subr.bf16.mxu0 0
    %1105 = vmatpush1.bf16.msra.mxu0 0
    %1106 = vmatprep.mubr.bf16.mxu0 0
    %1107 = vmatmul.mubr.bf16.gmra.mrb[0].mxu0 %v1070
    %v1108 = vpop.f32.mrb[0].mxu0
    %v1109 = vadd.f32 0.0, %v1108
    %v1110 = vpop.f32.mrb[0].mxu0
    %v1111 = vpop.f32.mrb[0].mxu0
    %v1112 = vpop.f32.mrb[0].mxu0
    %1113 = vdwg.mxu0
    %v1114 = vpack.c.bf16 %v1109, %v1064
    %v1116 = vsel %vm136, %v1114, 0
    %v1119 = vsel %vm254, %v133, 0
    %1121 = vmatprep.subr.bf16.mxu0 0
    %1122 = vmatpush1.bf16.msra.mxu0 %v1119
    %1123 = vmatprep.subr.bf16.mxu0 0
    %1124 = vmatpush1.bf16.msra.mxu0 0
    %1125 = vmatprep.subr.bf16.mxu0 0
    %1126 = vmatpush1.bf16.msra.mxu0 0
    %1127 = vmatprep.subr.bf16.mxu0 0
    %1128 = vmatpush1.bf16.msra.mxu0 0
    %1129 = vmatprep.subr.bf16.mxu0 0
    %1130 = vmatpush1.bf16.msra.mxu0 0
    %1131 = vmatprep.subr.bf16.mxu0 0
    %1132 = vmatpush1.bf16.msra.mxu0 0
    %1133 = vmatprep.subr.bf16.mxu0 0
    %1134 = vmatpush1.bf16.msra.mxu0 0
    %1135 = vmatprep.subr.bf16.mxu0 0
    %1136 = vmatpush1.bf16.msra.mxu0 0
    %1137 = vmatprep.subr.bf16.mxu0 0
    %1138 = vmatpush1.bf16.msra.mxu0 0
    %1139 = vmatprep.subr.bf16.mxu0 0
    %1140 = vmatpush1.bf16.msra.mxu0 0
    %1141 = vmatprep.subr.bf16.mxu0 0
    %1142 = vmatpush1.bf16.msra.mxu0 0
    %1143 = vmatprep.subr.bf16.mxu0 0
    %1144 = vmatpush1.bf16.msra.mxu0 0
    %1145 = vmatprep.subr.bf16.mxu0 0
    %1146 = vmatpush1.bf16.msra.mxu0 0
    %1147 = vmatprep.subr.bf16.mxu0 0
    %1148 = vmatpush1.bf16.msra.mxu0 0
    %1149 = vmatprep.subr.bf16.mxu0 0
    %1150 = vmatpush1.bf16.msra.mxu0 0
    %1151 = vmatprep.subr.bf16.mxu0 0
    %1152 = vmatpush1.bf16.msra.mxu0 0
    %1153 = vmatprep.mubr.bf16.mxu0 0
    %1154 = vmatmul.mubr.bf16.gmra.mrb[0].mxu0 %v1116
    %v1155 = vpop.f32.mrb[0].mxu0
    %v1156 = vadd.f32 0.0, %v1155
    %v1157 = vpop.f32.mrb[0].mxu0
    %v1158 = vpop.f32.mrb[0].mxu0
    %v1159 = vadd.f32 0.0, %v1158
    %v1160 = vpop.f32.mrb[0].mxu0
    %1161 = vdwg.mxu0
    %v1162 = vadd.f32 %v904, %v1156
    %v1163 = vadd.f32 %v905, %v1159
    %v1164 = vld [vmem:[%s3] sm:$0x1]
    %v1166 = vlaneseq
    %v1167 = vshrl.u32 %v1166, 7
    %v1168 = vsub.s32 0, %v1167
    %v1169 = vrot.slane %v1164, %v1168
    %v1171 = vadd.f32 %v1162, %v1169
    %v1172 = vadd.f32 %v1163, %v1169
    %1173 = vst.msk [vmem:[#allocation8] sm:$0xff] %vm85, %v1171
    %1174 = vst.msk [vmem:[#allocation8 + $0x8] sm:$0xff] %vm85, %v1172
    // Predicated region
    $region30: #{tpu_custom_call.1} parent=1 // pred_check
      _
    $region31: #{tpu_custom_call.1} parent=1 // pred_check_branch
      %1176 = sbr.rel (0) target = $region33
    $region32: #{tpu_custom_call.1} parent=1 // pred_region
      %s1178 = ssub.s32 256, 256
      %1179 = vsyncadd [#allocation4], %s1178
      %s1180 = sshll.u32 [#allocation8], 4
      %s1181 = int_to_ptr.vmem [resolvable:$true] %s1180
      %1186 = dma.vmem_to_hbm [thread:$0]  %s1181, 256, %s4, [#allocation4], 128, 128, 8
    $region33: #{tpu_custom_call.1} parent=1 // pred_fallthru
      _
    // Predicated region
    $region34: #{tpu_custom_call.1} parent=1 // pred_check
      _
    $region35: #{tpu_custom_call.1} parent=1 // pred_check_branch
      %1188 = sbr.rel (0) target = $region37
    $region36: #{tpu_custom_call.1} parent=1 // pred_region
      %1189 = dma.done [#allocation4], 256
    $region37: #{tpu_custom_call.1} parent=1 // pred_fallthru
      _
    %1190 = vsyncpa [#allocation3], 1
    %1191 = vsyncpa [#allocation6], 1
    %1192 = vsyncpa [#allocation4], 1

</llo_original>
